<compile_context>
chip_gen: v7x
topology: tpu7x:2x2x1
jax: 0.10.0
libtpu: 0.0.40
codegen_flags: <defaults>
</compile_context>

<pallas_src>
import functools

import jax
import jax.numpy as jnp
from jax.experimental import pallas as pl
from jax.experimental.pallas import tpu as pltpu


BODY_STRIDE = 4                      # body output stride (synthetic backbone)


# ---------------------------------------------------------------------------
# Generation-aware VMEM budget
# ---------------------------------------------------------------------------
def _vmem_limit_bytes():
    phys = None
    try:
        info = pltpu.get_tpu_info()
        phys = int(getattr(info, "vmem_capacity_bytes"))
    except Exception:
        phys = None
    if phys is None or phys <= 0:
        # Conservative fallback (safe on v7x's 64 MiB physical VMEM too).
        return 48 * 1024 * 1024
    # Leave ~25% headroom for compiler-internal scratch; cap at 100 MiB.
    return max(32 * 1024 * 1024, min(phys * 3 // 4, 100 * 1024 * 1024))


# ---------------------------------------------------------------------------
# Fused body + pool + head + cls kernel
# ---------------------------------------------------------------------------
def _fused_body_head_cls_kernel(x_ref, bw_ref, bb_ref, hw_ref, hb_ref,
                                cw_ref, cb_ref, o_ref, *scratch,
                                inv_pool, group, inner_steps):
    # grid = (pixel_tiles, inner_steps); axis 1 reduces over pool-window groups.
    bw = bw_ref[...]
    bb = bb_ref[...]

    # body 1x1 conv + bias + ReLU for `group` window positions, summed locally
    # (one accumulator RMW per grid step instead of one per window position).
    part = None
    for g in range(group):                                    # static unroll
        h = jnp.dot(x_ref[g], bw, preferred_element_type=jnp.float32)
        h = jnp.maximum(h + bb, 0.0)
        part = h if part is None else part + h

    def _head_and_cls(pooled_f32):
        pooled = (pooled_f32 * inv_pool).astype(jnp.bfloat16)       # (Pt, Cb)
        xpl = jnp.dot(pooled, hw_ref[...],
                      preferred_element_type=jnp.float32) + hb_ref[...]
        xpl = jnp.maximum(xpl, 0.0).astype(jnp.bfloat16)            # (Pt, Ch)
        # classifier heads, lane-dense: (K, Ch) . (Pt, Ch)^T -> (K, Pt)
        logits = jax.lax.dot_general(
            cw_ref[...], xpl, (((1,), (1,)), ((), ())),
            preferred_element_type=jnp.float32) + cb_ref[...]
        o_ref[...] = logits.astype(o_ref.dtype)

    if inner_steps == 1:
        # Whole pool window handled in this step: no accumulator scratch.
        _head_and_cls(part)
    else:
        acc_ref = scratch[0]
        k = pl.program_id(1)

        @pl.when(k == 0)
        def _():
            acc_ref[...] = part

        @pl.when(k > 0)
        def _():
            acc_ref[...] += part

        @pl.when(k == inner_steps - 1)
        def _():
            _head_and_cls(acc_ref[...])


def _pick_group_and_tile(P, Cin, Cb, Ch, K, S2, vmem_limit):
    """Jointly pick the pool-window group size G (divisor of S2) and the
    pooled-pixel tile Pt against an explicit VMEM byte budget."""
    budget = int(vmem_limit * 0.8)
    # Weight/bias blocks are double-buffered by the pipeline even with
    # constant index maps; account for both buffers.
    weight_bytes = 2 * (2 * (Cin * Cb + Cb * Ch + K * Ch) + 4 * (Cb + Ch + K))
    avail = max(budget - weight_bytes, 1 << 20)

    def pt_for(g):
        per_row = (2 * 2 * g * Cin      # (G, Pt, Cin) bf16 block, 2 buffers
                   + 2 * 2 * K          # (K, Pt) bf16 output, 2 buffers
                   + 4 * Cb)            # (Pt, Cb) f32 accumulator scratch
        return avail // per_row

    groups = [g for g in range(S2, 0, -1) if S2 % g == 0]
    G, Pt = groups[0], pt_for(groups[0])
    for g in groups:
        pt = pt_for(g)
        if pt >= min(P, 512):           # big enough tile: take the largest G
            G, Pt = g, pt
            break
        if pt > Pt:
            G, Pt = g, pt

    Pt = min(Pt, P, 8192)
    if P >= 256:
        # Keep >= 2 pixel tiles so the "parallel" axis can be megacore-sharded.
        Pt = min(Pt, max(128, (P // 2) // 128 * 128))
    if Pt < P:
        Pt = max(128, (Pt // 128) * 128)    # lane-aligned tiles when tiling
    return G, Pt


# ---------------------------------------------------------------------------
# Bilinear upsample kernel (align_corners=False), bf16 matmuls, f32 accumulate
# ---------------------------------------------------------------------------
def _upsample_kernel(x_ref, rh_ref, rwt_ref, o_ref):
    kb = x_ref.shape[0]
    rh = rh_ref[...]
    rwt = rwt_ref[...]
    for i in range(kb):                                         # static unroll
        tmp = jnp.dot(rh, x_ref[i, 0],
                      preferred_element_type=jnp.float32)       # (H, Ws) f32
        o_ref[0, i] = jnp.dot(tmp.astype(jnp.bfloat16), rwt,
                              preferred_element_type=jnp.float32)


def _interp_matrix(out_size, in_size):
    """Interpolation matrix matching F.interpolate(mode='bilinear',
    align_corners=False) along one axis.  Shape (out_size, in_size), f32."""
    scale = in_size / out_size
    src = jnp.maximum(
        (jnp.arange(out_size, dtype=jnp.float32) + 0.5) * scale - 0.5, 0.0)
    i0 = jnp.minimum(jnp.floor(src).astype(jnp.int32), in_size - 1)
    lam = src - i0.astype(jnp.float32)
    i1 = jnp.minimum(i0 + 1, in_size - 1)
    oh0 = jax.nn.one_hot(i0, in_size, dtype=jnp.float32)
    oh1 = jax.nn.one_hot(i1, in_size, dtype=jnp.float32)
    return oh0 * (1.0 - lam)[:, None] + oh1 * lam[:, None]


def bilinear_upsample_classes(logits_kbhw, out_hw, vmem_limit):
    """logits_kbhw: (K, B, Hs, Ws) bf16 -> (B, K, H, W) f32; PyTorch bilinear."""
    K, B, Hs, Ws = logits_kbhw.shape
    H, W = out_hw
    rh = _interp_matrix(H, Hs).astype(jnp.bfloat16)       # (H, Hs)
    rwt = _interp_matrix(W, Ws).T.astype(jnp.bfloat16)    # (Ws, W)

    budget = int(vmem_limit * 0.6)
    per_img = 2 * (Hs * Ws * 2) + 2 * (H * W * 4)    # bf16 in + f32 out, 2 bufs
    fixed = 2 * 2 * (H * Hs + Ws * W)                # bf16 interp mats, 2 bufs
    kb = 1
    for d in range(1, K + 1):                        # largest divisor of K that fits
        if K % d == 0 and fixed + d * per_img <= budget:
            kb = d
    if B == 1 and K >= 2 and K // kb < 2:
        # keep >= 2 blocks on the parallel grid for megacore sharding (v7x)
        kb = max(d for d in range(1, K // 2 + 1) if K % d == 0)

    return pl.pallas_call(
        _upsample_kernel,
        out_shape=jax.ShapeDtypeStruct((B, K, H, W), jnp.float32),
        grid=(B, K // kb),
        in_specs=[
            pl.BlockSpec((kb, 1, Hs, Ws), lambda b, kk: (kk, b, 0, 0)),
            pl.BlockSpec((H, Hs), lambda b, kk: (0, 0)),
            pl.BlockSpec((Ws, W), lambda b, kk: (0, 0)),
        ],
        out_specs=pl.BlockSpec((1, kb, H, W), lambda b, kk: (b, kk, 0, 0)),
        compiler_params=pltpu.CompilerParams(
            dimension_semantics=("parallel", "parallel"),
            vmem_limit_bytes=vmem_limit),
    )(logits_kbhw.astype(jnp.bfloat16), rh, rwt)


# ---------------------------------------------------------------------------
# Module: parameters + forward
# ---------------------------------------------------------------------------
def init_params(key, in_channels, body_channels, head_channels, classes):
    ks = jax.random.split(key, 6)
    tot = sum(classes)
    return {
        # synthetic body backbone (1x1 conv)
        "body_w": jax.random.normal(ks[0], (body_channels, in_channels),
                                    jnp.float32) / jnp.sqrt(in_channels),
        "body_b": 0.1 * jax.random.normal(ks[1], (body_channels,), jnp.float32),
        # synthetic head (1x1 conv)
        "head_w": jax.random.normal(ks[2], (head_channels, body_channels),
                                    jnp.float32) / jnp.sqrt(body_channels),
        "head_b": 0.1 * jax.random.normal(ks[3], (head_channels,), jnp.float32),
        # nn.ModuleList([Conv2d(head_channels, c, 1, bias=True) for c in classes])
        # stacked on the output-channel axis (concat over dim=1 in forward).
        "cls_w": jax.random.normal(ks[4], (tot, head_channels),
                                   jnp.float32) / jnp.sqrt(head_channels),
        "cls_b": 0.1 * jax.random.normal(ks[5], (tot,), jnp.float32),
    }


def incremental_segmentation_forward(params, x_nchw):
    """Reproduces IncrementalSegmentationModule.forward (default flags).

    Returns (sem_logits [B, tot_classes, H, W], {}).
    """
    B, Cin, H, W = x_nchw.shape
    S = BODY_STRIDE
    assert H % S == 0 and W % S == 0
    Hs, Ws = H // S, W // S
    Cb = params["body_w"].shape[0]
    Ch = params["head_w"].shape[0]
    K = params["cls_w"].shape[0]
    P = B * Hs * Ws                       # total pooled pixels
    S2 = S * S

    vmem_limit = _vmem_limit_bytes()
    G, Pt = _pick_group_and_tile(P, Cin, Cb, Ch, K, S2, vmem_limit)
    T = pl.cdiv(P, Pt)
    P_pad = T * Pt
    inner = S2 // G

    # ---- layout plumbing (one cheap XLA transpose of the input):
    # (B, Cin, H, W) -> (S*S, P, Cin): pool-window position major, channels last
    xr = jnp.transpose(x_nchw, (0, 2, 3, 1))                 # (B, H, W, Cin)
    xr = xr.reshape(B, Hs, S, Ws, S, Cin)
    xr = jnp.transpose(xr, (2, 4, 0, 1, 3, 5))               # (S, S, B, Hs, Ws, C)
    xr = xr.reshape(S2, P, Cin)
    if P_pad != P:
        xr = jnp.pad(xr, ((0, 0), (0, P_pad - P), (0, 0)))
    xr = xr.astype(jnp.bfloat16)

    bw = params["body_w"].T.astype(jnp.bfloat16)             # (Cin, Cb)
    bb = params["body_b"].reshape(1, Cb).astype(jnp.float32)
    hw = params["head_w"].T.astype(jnp.bfloat16)             # (Cb, Ch)
    hb = params["head_b"].reshape(1, Ch).astype(jnp.float32)
    cw = params["cls_w"].astype(jnp.bfloat16)                # (K, Ch)
    cb = params["cls_b"].reshape(K, 1).astype(jnp.float32)

    scratch = [] if inner == 1 else [pltpu.VMEM((Pt, Cb), jnp.float32)]

    # ---- fused body-conv+ReLU -> 4x4 avg-pool -> head-conv+ReLU -> cls heads
    logits = pl.pallas_call(
        functools.partial(_fused_body_head_cls_kernel,
                          inv_pool=1.0 / S2, group=G, inner_steps=inner),
        out_shape=jax.ShapeDtypeStruct((K, P_pad), jnp.bfloat16),
        grid=(T, inner),
        in_specs=[
            pl.BlockSpec((G, Pt, Cin), lambda t, k: (k, t, 0)),
            pl.BlockSpec((Cin, Cb), lambda t, k: (0, 0)),
            pl.BlockSpec((1, Cb), lambda t, k: (0, 0)),
            pl.BlockSpec((Cb, Ch), lambda t, k: (0, 0)),
            pl.BlockSpec((1, Ch), lambda t, k: (0, 0)),
            pl.BlockSpec((K, Ch), lambda t, k: (0, 0)),
            pl.BlockSpec((K, 1), lambda t, k: (0, 0)),
        ],
        out_specs=pl.BlockSpec((K, Pt), lambda t, k: (0, t)),
        scratch_shapes=scratch,
        compiler_params=pltpu.CompilerParams(
            dimension_semantics=("parallel", "arbitrary"),
            vmem_limit_bytes=vmem_limit),
    )(xr, bw, bb, hw, hb, cw, cb)

    # (K, P) -> (K, B, Hs, Ws) is a free reshape; the upsample's BlockSpecs do
    # the (class, batch) -> (batch, class) re-indexing (no NCHW transpose).
    logits = logits[:, :P].reshape(K, B, Hs, Ws)

    # ---- F.interpolate(size=(H, W), mode='bilinear', align_corners=False)
    sem_logits = bilinear_upsample_classes(logits, (H, W), vmem_limit)
    return sem_logits, {}


if __name__ == "__main__":
    key = jax.random.PRNGKey(0)
    kp, kx = jax.random.split(key)

    B, Cin, H, W = 2, 4, 16, 16
    body_channels = 32
    head_channels = 32
    classes = [4, 2]            # incremental tasks: 4 base classes + 2 new

    params = init_params(kp, Cin, body_channels, head_channels, classes)
    x = jax.random.normal(kx, (B, Cin, H, W), jnp.float32)

    fwd = jax.jit(incremental_segmentation_forward)
    sem_logits, extra = fwd(params, x)
    sem_logits = jax.block_until_ready(sem_logits)

    assert sem_logits.shape == (B, sum(classes), H, W)
    assert bool(jnp.all(jnp.isfinite(sem_logits)))
    print("KERNEL_OK")
</pallas_src>

<mosaic_0001>
module attributes {stable_mosaic.version = 11 : i64} {
  func.func @_fused_body_head_cls_kernel(%arg0: i32, %arg1: i32, %arg2: memref<16x32x4xbf16, #tpu.memory_space<vmem>>, %arg3: memref<4x32xbf16, #tpu.memory_space<vmem>>, %arg4: memref<1x32xf32, #tpu.memory_space<vmem>>, %arg5: memref<32x32xbf16, #tpu.memory_space<vmem>>, %arg6: memref<1x32xf32, #tpu.memory_space<vmem>>, %arg7: memref<6x32xbf16, #tpu.memory_space<vmem>>, %arg8: memref<6x1xf32, #tpu.memory_space<vmem>>, %arg9: memref<6x32xbf16, #tpu.memory_space<vmem>>) attributes {dimension_semantics = [#tpu.dimension_semantics<parallel>, #tpu.dimension_semantics<arbitrary>], iteration_bounds = array<i64: 1, 1>, scalar_prefetch = 0 : i64, scratch_operands = 0 : i64, tpu.core_type = #tpu.core_type<tc>, window_params = [{transform_indices = @transform_0, window_bounds = array<i64: 16, 32, 4>}, {pipeline_mode = #tpu.pipeline_mode<synchronous>, transform_indices = @transform_1, window_bounds = array<i64: 4, 32>}, {pipeline_mode = #tpu.pipeline_mode<synchronous>, transform_indices = @transform_2, window_bounds = array<i64: 1, 32>}, {pipeline_mode = #tpu.pipeline_mode<synchronous>, transform_indices = @transform_3, window_bounds = array<i64: 32, 32>}, {pipeline_mode = #tpu.pipeline_mode<synchronous>, transform_indices = @transform_4, window_bounds = array<i64: 1, 32>}, {pipeline_mode = #tpu.pipeline_mode<synchronous>, transform_indices = @transform_5, window_bounds = array<i64: 6, 32>}, {pipeline_mode = #tpu.pipeline_mode<synchronous>, transform_indices = @transform_6, window_bounds = array<i64: 6, 1>}, {transform_indices = @transform_7, window_bounds = array<i64: 6, 32>}]} {
    %c0 = arith.constant 0 : index
    %c0_0 = arith.constant 0 : index
    %0 = vector.load %arg3[%c0, %c0_0] : memref<4x32xbf16, #tpu.memory_space<vmem>>, vector<4x32xbf16>
    %c0_1 = arith.constant 0 : index
    %c0_2 = arith.constant 0 : index
    %1 = vector.load %arg4[%c0_1, %c0_2] : memref<1x32xf32, #tpu.memory_space<vmem>>, vector<1x32xf32>
    %c0_3 = arith.constant 0 : index
    %c0_4 = arith.constant 0 : index
    %c0_5 = arith.constant 0 : index
    %2 = vector.load %arg2[%c0_3, %c0_4, %c0_5] : memref<16x32x4xbf16, #tpu.memory_space<vmem>>, vector<1x32x4xbf16>
    %3 = vector.shape_cast %2 : vector<1x32x4xbf16> to vector<32x4xbf16>
    %cst = arith.constant dense<0.000000e+00> : vector<32x32xf32>
    %4 = tpu.matmul %3, %0, %cst {dimension_numbers = #tpu.dot_dimension_numbers<[1], [0], [0], [1], [0, 0, 1, 1], [], []>} : vector<32x4xbf16>, vector<4x32xbf16>, vector<32x32xf32> -> vector<32x32xf32>
    %5 = vector.broadcast %1 : vector<1x32xf32> to vector<32x32xf32>
    %6 = arith.addf %4, %5 : vector<32x32xf32>
    %cst_6 = arith.constant 0.000000e+00 : f32
    %7 = vector.broadcast %cst_6 : f32 to vector<32x32xf32>
    %8 = arith.maximumf %6, %7 : vector<32x32xf32>
    %c1 = arith.constant 1 : index
    %c0_7 = arith.constant 0 : index
    %c0_8 = arith.constant 0 : index
    %9 = vector.load %arg2[%c1, %c0_7, %c0_8] : memref<16x32x4xbf16, #tpu.memory_space<vmem>>, vector<1x32x4xbf16>
    %10 = vector.shape_cast %9 : vector<1x32x4xbf16> to vector<32x4xbf16>
    %cst_9 = arith.constant dense<0.000000e+00> : vector<32x32xf32>
    %11 = tpu.matmul %10, %0, %cst_9 {dimension_numbers = #tpu.dot_dimension_numbers<[1], [0], [0], [1], [0, 0, 1, 1], [], []>} : vector<32x4xbf16>, vector<4x32xbf16>, vector<32x32xf32> -> vector<32x32xf32>
    %12 = vector.broadcast %1 : vector<1x32xf32> to vector<32x32xf32>
    %13 = arith.addf %11, %12 : vector<32x32xf32>
    %cst_10 = arith.constant 0.000000e+00 : f32
    %14 = vector.broadcast %cst_10 : f32 to vector<32x32xf32>
    %15 = arith.maximumf %13, %14 : vector<32x32xf32>
    %16 = arith.addf %8, %15 : vector<32x32xf32>
    %c2 = arith.constant 2 : index
    %c0_11 = arith.constant 0 : index
    %c0_12 = arith.constant 0 : index
    %17 = vector.load %arg2[%c2, %c0_11, %c0_12] : memref<16x32x4xbf16, #tpu.memory_space<vmem>>, vector<1x32x4xbf16>
    %18 = vector.shape_cast %17 : vector<1x32x4xbf16> to vector<32x4xbf16>
    %cst_13 = arith.constant dense<0.000000e+00> : vector<32x32xf32>
    %19 = tpu.matmul %18, %0, %cst_13 {dimension_numbers = #tpu.dot_dimension_numbers<[1], [0], [0], [1], [0, 0, 1, 1], [], []>} : vector<32x4xbf16>, vector<4x32xbf16>, vector<32x32xf32> -> vector<32x32xf32>
    %20 = vector.broadcast %1 : vector<1x32xf32> to vector<32x32xf32>
    %21 = arith.addf %19, %20 : vector<32x32xf32>
    %cst_14 = arith.constant 0.000000e+00 : f32
    %22 = vector.broadcast %cst_14 : f32 to vector<32x32xf32>
    %23 = arith.maximumf %21, %22 : vector<32x32xf32>
    %24 = arith.addf %16, %23 : vector<32x32xf32>
    %c3 = arith.constant 3 : index
    %c0_15 = arith.constant 0 : index
    %c0_16 = arith.constant 0 : index
    %25 = vector.load %arg2[%c3, %c0_15, %c0_16] : memref<16x32x4xbf16, #tpu.memory_space<vmem>>, vector<1x32x4xbf16>
    %26 = vector.shape_cast %25 : vector<1x32x4xbf16> to vector<32x4xbf16>
    %cst_17 = arith.constant dense<0.000000e+00> : vector<32x32xf32>
    %27 = tpu.matmul %26, %0, %cst_17 {dimension_numbers = #tpu.dot_dimension_numbers<[1], [0], [0], [1], [0, 0, 1, 1], [], []>} : vector<32x4xbf16>, vector<4x32xbf16>, vector<32x32xf32> -> vector<32x32xf32>
    %28 = vector.broadcast %1 : vector<1x32xf32> to vector<32x32xf32>
    %29 = arith.addf %27, %28 : vector<32x32xf32>
    %cst_18 = arith.constant 0.000000e+00 : f32
    %30 = vector.broadcast %cst_18 : f32 to vector<32x32xf32>
    %31 = arith.maximumf %29, %30 : vector<32x32xf32>
    %32 = arith.addf %24, %31 : vector<32x32xf32>
    %c4 = arith.constant 4 : index
    %c0_19 = arith.constant 0 : index
    %c0_20 = arith.constant 0 : index
    %33 = vector.load %arg2[%c4, %c0_19, %c0_20] : memref<16x32x4xbf16, #tpu.memory_space<vmem>>, vector<1x32x4xbf16>
    %34 = vector.shape_cast %33 : vector<1x32x4xbf16> to vector<32x4xbf16>
    %cst_21 = arith.constant dense<0.000000e+00> : vector<32x32xf32>
    %35 = tpu.matmul %34, %0, %cst_21 {dimension_numbers = #tpu.dot_dimension_numbers<[1], [0], [0], [1], [0, 0, 1, 1], [], []>} : vector<32x4xbf16>, vector<4x32xbf16>, vector<32x32xf32> -> vector<32x32xf32>
    %36 = vector.broadcast %1 : vector<1x32xf32> to vector<32x32xf32>
    %37 = arith.addf %35, %36 : vector<32x32xf32>
    %cst_22 = arith.constant 0.000000e+00 : f32
    %38 = vector.broadcast %cst_22 : f32 to vector<32x32xf32>
    %39 = arith.maximumf %37, %38 : vector<32x32xf32>
    %40 = arith.addf %32, %39 : vector<32x32xf32>
    %c5 = arith.constant 5 : index
    %c0_23 = arith.constant 0 : index
    %c0_24 = arith.constant 0 : index
    %41 = vector.load %arg2[%c5, %c0_23, %c0_24] : memref<16x32x4xbf16, #tpu.memory_space<vmem>>, vector<1x32x4xbf16>
    %42 = vector.shape_cast %41 : vector<1x32x4xbf16> to vector<32x4xbf16>
    %cst_25 = arith.constant dense<0.000000e+00> : vector<32x32xf32>
    %43 = tpu.matmul %42, %0, %cst_25 {dimension_numbers = #tpu.dot_dimension_numbers<[1], [0], [0], [1], [0, 0, 1, 1], [], []>} : vector<32x4xbf16>, vector<4x32xbf16>, vector<32x32xf32> -> vector<32x32xf32>
    %44 = vector.broadcast %1 : vector<1x32xf32> to vector<32x32xf32>
    %45 = arith.addf %43, %44 : vector<32x32xf32>
    %cst_26 = arith.constant 0.000000e+00 : f32
    %46 = vector.broadcast %cst_26 : f32 to vector<32x32xf32>
    %47 = arith.maximumf %45, %46 : vector<32x32xf32>
    %48 = arith.addf %40, %47 : vector<32x32xf32>
    %c6 = arith.constant 6 : index
    %c0_27 = arith.constant 0 : index
    %c0_28 = arith.constant 0 : index
    %49 = vector.load %arg2[%c6, %c0_27, %c0_28] : memref<16x32x4xbf16, #tpu.memory_space<vmem>>, vector<1x32x4xbf16>
    %50 = vector.shape_cast %49 : vector<1x32x4xbf16> to vector<32x4xbf16>
    %cst_29 = arith.constant dense<0.000000e+00> : vector<32x32xf32>
    %51 = tpu.matmul %50, %0, %cst_29 {dimension_numbers = #tpu.dot_dimension_numbers<[1], [0], [0], [1], [0, 0, 1, 1], [], []>} : vector<32x4xbf16>, vector<4x32xbf16>, vector<32x32xf32> -> vector<32x32xf32>
    %52 = vector.broadcast %1 : vector<1x32xf32> to vector<32x32xf32>
    %53 = arith.addf %51, %52 : vector<32x32xf32>
    %cst_30 = arith.constant 0.000000e+00 : f32
    %54 = vector.broadcast %cst_30 : f32 to vector<32x32xf32>
    %55 = arith.maximumf %53, %54 : vector<32x32xf32>
    %56 = arith.addf %48, %55 : vector<32x32xf32>
    %c7 = arith.constant 7 : index
    %c0_31 = arith.constant 0 : index
    %c0_32 = arith.constant 0 : index
    %57 = vector.load %arg2[%c7, %c0_31, %c0_32] : memref<16x32x4xbf16, #tpu.memory_space<vmem>>, vector<1x32x4xbf16>
    %58 = vector.shape_cast %57 : vector<1x32x4xbf16> to vector<32x4xbf16>
    %cst_33 = arith.constant dense<0.000000e+00> : vector<32x32xf32>
    %59 = tpu.matmul %58, %0, %cst_33 {dimension_numbers = #tpu.dot_dimension_numbers<[1], [0], [0], [1], [0, 0, 1, 1], [], []>} : vector<32x4xbf16>, vector<4x32xbf16>, vector<32x32xf32> -> vector<32x32xf32>
    %60 = vector.broadcast %1 : vector<1x32xf32> to vector<32x32xf32>
    %61 = arith.addf %59, %60 : vector<32x32xf32>
    %cst_34 = arith.constant 0.000000e+00 : f32
    %62 = vector.broadcast %cst_34 : f32 to vector<32x32xf32>
    %63 = arith.maximumf %61, %62 : vector<32x32xf32>
    %64 = arith.addf %56, %63 : vector<32x32xf32>
    %c8 = arith.constant 8 : index
    %c0_35 = arith.constant 0 : index
    %c0_36 = arith.constant 0 : index
    %65 = vector.load %arg2[%c8, %c0_35, %c0_36] : memref<16x32x4xbf16, #tpu.memory_space<vmem>>, vector<1x32x4xbf16>
    %66 = vector.shape_cast %65 : vector<1x32x4xbf16> to vector<32x4xbf16>
    %cst_37 = arith.constant dense<0.000000e+00> : vector<32x32xf32>
    %67 = tpu.matmul %66, %0, %cst_37 {dimension_numbers = #tpu.dot_dimension_numbers<[1], [0], [0], [1], [0, 0, 1, 1], [], []>} : vector<32x4xbf16>, vector<4x32xbf16>, vector<32x32xf32> -> vector<32x32xf32>
    %68 = vector.broadcast %1 : vector<1x32xf32> to vector<32x32xf32>
    %69 = arith.addf %67, %68 : vector<32x32xf32>
    %cst_38 = arith.constant 0.000000e+00 : f32
    %70 = vector.broadcast %cst_38 : f32 to vector<32x32xf32>
    %71 = arith.maximumf %69, %70 : vector<32x32xf32>
    %72 = arith.addf %64, %71 : vector<32x32xf32>
    %c9 = arith.constant 9 : index
    %c0_39 = arith.constant 0 : index
    %c0_40 = arith.constant 0 : index
    %73 = vector.load %arg2[%c9, %c0_39, %c0_40] : memref<16x32x4xbf16, #tpu.memory_space<vmem>>, vector<1x32x4xbf16>
    %74 = vector.shape_cast %73 : vector<1x32x4xbf16> to vector<32x4xbf16>
    %cst_41 = arith.constant dense<0.000000e+00> : vector<32x32xf32>
    %75 = tpu.matmul %74, %0, %cst_41 {dimension_numbers = #tpu.dot_dimension_numbers<[1], [0], [0], [1], [0, 0, 1, 1], [], []>} : vector<32x4xbf16>, vector<4x32xbf16>, vector<32x32xf32> -> vector<32x32xf32>
    %76 = vector.broadcast %1 : vector<1x32xf32> to vector<32x32xf32>
    %77 = arith.addf %75, %76 : vector<32x32xf32>
    %cst_42 = arith.constant 0.000000e+00 : f32
    %78 = vector.broadcast %cst_42 : f32 to vector<32x32xf32>
    %79 = arith.maximumf %77, %78 : vector<32x32xf32>
    %80 = arith.addf %72, %79 : vector<32x32xf32>
    %c10 = arith.constant 10 : index
    %c0_43 = arith.constant 0 : index
    %c0_44 = arith.constant 0 : index
    %81 = vector.load %arg2[%c10, %c0_43, %c0_44] : memref<16x32x4xbf16, #tpu.memory_space<vmem>>, vector<1x32x4xbf16>
    %82 = vector.shape_cast %81 : vector<1x32x4xbf16> to vector<32x4xbf16>
    %cst_45 = arith.constant dense<0.000000e+00> : vector<32x32xf32>
    %83 = tpu.matmul %82, %0, %cst_45 {dimension_numbers = #tpu.dot_dimension_numbers<[1], [0], [0], [1], [0, 0, 1, 1], [], []>} : vector<32x4xbf16>, vector<4x32xbf16>, vector<32x32xf32> -> vector<32x32xf32>
    %84 = vector.broadcast %1 : vector<1x32xf32> to vector<32x32xf32>
    %85 = arith.addf %83, %84 : vector<32x32xf32>
    %cst_46 = arith.constant 0.000000e+00 : f32
    %86 = vector.broadcast %cst_46 : f32 to vector<32x32xf32>
    %87 = arith.maximumf %85, %86 : vector<32x32xf32>
    %88 = arith.addf %80, %87 : vector<32x32xf32>
    %c11 = arith.constant 11 : index
    %c0_47 = arith.constant 0 : index
    %c0_48 = arith.constant 0 : index
    %89 = vector.load %arg2[%c11, %c0_47, %c0_48] : memref<16x32x4xbf16, #tpu.memory_space<vmem>>, vector<1x32x4xbf16>
    %90 = vector.shape_cast %89 : vector<1x32x4xbf16> to vector<32x4xbf16>
    %cst_49 = arith.constant dense<0.000000e+00> : vector<32x32xf32>
    %91 = tpu.matmul %90, %0, %cst_49 {dimension_numbers = #tpu.dot_dimension_numbers<[1], [0], [0], [1], [0, 0, 1, 1], [], []>} : vector<32x4xbf16>, vector<4x32xbf16>, vector<32x32xf32> -> vector<32x32xf32>
    %92 = vector.broadcast %1 : vector<1x32xf32> to vector<32x32xf32>
    %93 = arith.addf %91, %92 : vector<32x32xf32>
    %cst_50 = arith.constant 0.000000e+00 : f32
    %94 = vector.broadcast %cst_50 : f32 to vector<32x32xf32>
    %95 = arith.maximumf %93, %94 : vector<32x32xf32>
    %96 = arith.addf %88, %95 : vector<32x32xf32>
    %c12 = arith.constant 12 : index
    %c0_51 = arith.constant 0 : index
    %c0_52 = arith.constant 0 : index
    %97 = vector.load %arg2[%c12, %c0_51, %c0_52] : memref<16x32x4xbf16, #tpu.memory_space<vmem>>, vector<1x32x4xbf16>
    %98 = vector.shape_cast %97 : vector<1x32x4xbf16> to vector<32x4xbf16>
    %cst_53 = arith.constant dense<0.000000e+00> : vector<32x32xf32>
    %99 = tpu.matmul %98, %0, %cst_53 {dimension_numbers = #tpu.dot_dimension_numbers<[1], [0], [0], [1], [0, 0, 1, 1], [], []>} : vector<32x4xbf16>, vector<4x32xbf16>, vector<32x32xf32> -> vector<32x32xf32>
    %100 = vector.broadcast %1 : vector<1x32xf32> to vector<32x32xf32>
    %101 = arith.addf %99, %100 : vector<32x32xf32>
    %cst_54 = arith.constant 0.000000e+00 : f32
    %102 = vector.broadcast %cst_54 : f32 to vector<32x32xf32>
    %103 = arith.maximumf %101, %102 : vector<32x32xf32>
    %104 = arith.addf %96, %103 : vector<32x32xf32>
    %c13 = arith.constant 13 : index
    %c0_55 = arith.constant 0 : index
    %c0_56 = arith.constant 0 : index
    %105 = vector.load %arg2[%c13, %c0_55, %c0_56] : memref<16x32x4xbf16, #tpu.memory_space<vmem>>, vector<1x32x4xbf16>
    %106 = vector.shape_cast %105 : vector<1x32x4xbf16> to vector<32x4xbf16>
    %cst_57 = arith.constant dense<0.000000e+00> : vector<32x32xf32>
    %107 = tpu.matmul %106, %0, %cst_57 {dimension_numbers = #tpu.dot_dimension_numbers<[1], [0], [0], [1], [0, 0, 1, 1], [], []>} : vector<32x4xbf16>, vector<4x32xbf16>, vector<32x32xf32> -> vector<32x32xf32>
    %108 = vector.broadcast %1 : vector<1x32xf32> to vector<32x32xf32>
    %109 = arith.addf %107, %108 : vector<32x32xf32>
    %cst_58 = arith.constant 0.000000e+00 : f32
    %110 = vector.broadcast %cst_58 : f32 to vector<32x32xf32>
    %111 = arith.maximumf %109, %110 : vector<32x32xf32>
    %112 = arith.addf %104, %111 : vector<32x32xf32>
    %c14 = arith.constant 14 : index
    %c0_59 = arith.constant 0 : index
    %c0_60 = arith.constant 0 : index
    %113 = vector.load %arg2[%c14, %c0_59, %c0_60] : memref<16x32x4xbf16, #tpu.memory_space<vmem>>, vector<1x32x4xbf16>
    %114 = vector.shape_cast %113 : vector<1x32x4xbf16> to vector<32x4xbf16>
    %cst_61 = arith.constant dense<0.000000e+00> : vector<32x32xf32>
    %115 = tpu.matmul %114, %0, %cst_61 {dimension_numbers = #tpu.dot_dimension_numbers<[1], [0], [0], [1], [0, 0, 1, 1], [], []>} : vector<32x4xbf16>, vector<4x32xbf16>, vector<32x32xf32> -> vector<32x32xf32>
    %116 = vector.broadcast %1 : vector<1x32xf32> to vector<32x32xf32>
    %117 = arith.addf %115, %116 : vector<32x32xf32>
    %cst_62 = arith.constant 0.000000e+00 : f32
    %118 = vector.broadcast %cst_62 : f32 to vector<32x32xf32>
    %119 = arith.maximumf %117, %118 : vector<32x32xf32>
    %120 = arith.addf %112, %119 : vector<32x32xf32>
    %c15 = arith.constant 15 : index
    %c0_63 = arith.constant 0 : index
    %c0_64 = arith.constant 0 : index
    %121 = vector.load %arg2[%c15, %c0_63, %c0_64] : memref<16x32x4xbf16, #tpu.memory_space<vmem>>, vector<1x32x4xbf16>
    %122 = vector.shape_cast %121 : vector<1x32x4xbf16> to vector<32x4xbf16>
    %cst_65 = arith.constant dense<0.000000e+00> : vector<32x32xf32>
    %123 = tpu.matmul %122, %0, %cst_65 {dimension_numbers = #tpu.dot_dimension_numbers<[1], [0], [0], [1], [0, 0, 1, 1], [], []>} : vector<32x4xbf16>, vector<4x32xbf16>, vector<32x32xf32> -> vector<32x32xf32>
    %124 = vector.broadcast %1 : vector<1x32xf32> to vector<32x32xf32>
    %125 = arith.addf %123, %124 : vector<32x32xf32>
    %cst_66 = arith.constant 0.000000e+00 : f32
    %126 = vector.broadcast %cst_66 : f32 to vector<32x32xf32>
    %127 = arith.maximumf %125, %126 : vector<32x32xf32>
    %128 = arith.addf %120, %127 : vector<32x32xf32>
    %cst_67 = arith.constant 6.250000e-02 : f32
    %129 = vector.broadcast %cst_67 : f32 to vector<32x32xf32>
    %130 = arith.mulf %128, %129 : vector<32x32xf32>
    %131 = arith.truncf %130 : vector<32x32xf32> to vector<32x32xbf16>
    %c0_68 = arith.constant 0 : index
    %c0_69 = arith.constant 0 : index
    %132 = vector.load %arg5[%c0_68, %c0_69] : memref<32x32xbf16, #tpu.memory_space<vmem>>, vector<32x32xbf16>
    %cst_70 = arith.constant dense<0.000000e+00> : vector<32x32xf32>
    %133 = tpu.matmul %131, %132, %cst_70 {dimension_numbers = #tpu.dot_dimension_numbers<[1], [0], [0], [1], [0, 0, 1, 1], [], []>} : vector<32x32xbf16>, vector<32x32xbf16>, vector<32x32xf32> -> vector<32x32xf32>
    %c0_71 = arith.constant 0 : index
    %c0_72 = arith.constant 0 : index
    %134 = vector.load %arg6[%c0_71, %c0_72] : memref<1x32xf32, #tpu.memory_space<vmem>>, vector<1x32xf32>
    %135 = vector.broadcast %134 : vector<1x32xf32> to vector<32x32xf32>
    %136 = arith.addf %133, %135 : vector<32x32xf32>
    %cst_73 = arith.constant 0.000000e+00 : f32
    %137 = vector.broadcast %cst_73 : f32 to vector<32x32xf32>
    %138 = arith.maximumf %136, %137 : vector<32x32xf32>
    %139 = arith.truncf %138 : vector<32x32xf32> to vector<32x32xbf16>
    %c0_74 = arith.constant 0 : index
    %c0_75 = arith.constant 0 : index
    %140 = vector.load %arg7[%c0_74, %c0_75] : memref<6x32xbf16, #tpu.memory_space<vmem>>, vector<6x32xbf16>
    %cst_76 = arith.constant dense<0.000000e+00> : vector<6x32xf32>
    %141 = tpu.matmul %140, %139, %cst_76 {dimension_numbers = #tpu.dot_dimension_numbers<[1], [1], [0], [0], [0, 0, 1, 0], [], []>} : vector<6x32xbf16>, vector<32x32xbf16>, vector<6x32xf32> -> vector<6x32xf32>
    %c0_77 = arith.constant 0 : index
    %c0_78 = arith.constant 0 : index
    %142 = vector.load %arg8[%c0_77, %c0_78] : memref<6x1xf32, #tpu.memory_space<vmem>>, vector<6x1xf32>
    %143 = vector.broadcast %142 : vector<6x1xf32> to vector<6x32xf32>
    %144 = arith.addf %141, %143 : vector<6x32xf32>
    %145 = arith.truncf %144 : vector<6x32xf32> to vector<6x32xbf16>
    %c0_79 = arith.constant 0 : index
    %c0_80 = arith.constant 0 : index
    %146 = vector.load %arg9[%c0_79, %c0_80] : memref<6x32xbf16, #tpu.memory_space<vmem>>, vector<6x32xbf16>
    tpu.vector_store %arg9[%c0_79, %c0_80], %145 {strides = array<i32>} : memref<6x32xbf16, #tpu.memory_space<vmem>>, vector<6x32xbf16>,
    return
  }
  func.func @transform_0(%arg0: i32, %arg1: i32) -> (i32, i32, i32) {
    %c0_i32 = arith.constant 0 : i32
    %c0_i32_0 = arith.constant 0 : i32
    return %arg1, %arg0, %c0_i32 : i32, i32, i32
  }
  func.func @transform_1(%arg0: i32, %arg1: i32) -> (i32, i32) {
    %c0_i32 = arith.constant 0 : i32
    %c0_i32_0 = arith.constant 0 : i32
    %c0_i32_1 = arith.constant 0 : i32
    return %c0_i32, %c0_i32_0 : i32, i32
  }
  func.func @transform_2(%arg0: i32, %arg1: i32) -> (i32, i32) {
    %c0_i32 = arith.constant 0 : i32
    %c0_i32_0 = arith.constant 0 : i32
    %c0_i32_1 = arith.constant 0 : i32
    return %c0_i32, %c0_i32_0 : i32, i32
  }
  func.func @transform_3(%arg0: i32, %arg1: i32) -> (i32, i32) {
    %c0_i32 = arith.constant 0 : i32
    %c0_i32_0 = arith.constant 0 : i32
    %c0_i32_1 = arith.constant 0 : i32
    return %c0_i32, %c0_i32_0 : i32, i32
  }
  func.func @transform_4(%arg0: i32, %arg1: i32) -> (i32, i32) {
    %c0_i32 = arith.constant 0 : i32
    %c0_i32_0 = arith.constant 0 : i32
    %c0_i32_1 = arith.constant 0 : i32
    return %c0_i32, %c0_i32_0 : i32, i32
  }
  func.func @transform_5(%arg0: i32, %arg1: i32) -> (i32, i32) {
    %c0_i32 = arith.constant 0 : i32
    %c0_i32_0 = arith.constant 0 : i32
    %c0_i32_1 = arith.constant 0 : i32
    return %c0_i32, %c0_i32_0 : i32, i32
  }
  func.func @transform_6(%arg0: i32, %arg1: i32) -> (i32, i32) {
    %c0_i32 = arith.constant 0 : i32
    %c0_i32_0 = arith.constant 0 : i32
    %c0_i32_1 = arith.constant 0 : i32
    return %c0_i32, %c0_i32_0 : i32, i32
  }
  func.func @transform_7(%arg0: i32, %arg1: i32) -> (i32, i32) {
    %c0_i32 = arith.constant 0 : i32
    %c0_i32_0 = arith.constant 0 : i32
    return %c0_i32, %arg0 : i32, i32
  }
}

module attributes {stable_mosaic.version = 11 : i64} {
  func.func @_upsample_kernel(%arg0: i32, %arg1: i32, %arg2: memref<6x1x4x4xbf16, #tpu.memory_space<vmem>>, %arg3: memref<16x4xbf16, #tpu.memory_space<vmem>>, %arg4: memref<4x16xbf16, #tpu.memory_space<vmem>>, %arg5: memref<1x6x16x16xf32, #tpu.memory_space<vmem>>) attributes {dimension_semantics = [#tpu.dimension_semantics<parallel>, #tpu.dimension_semantics<parallel>], iteration_bounds = array<i64: 2, 1>, scalar_prefetch = 0 : i64, scratch_operands = 0 : i64, tpu.core_type = #tpu.core_type<tc>, window_params = [{transform_indices = @transform_0, window_bounds = array<i64: 6, 1, 4, 4>}, {pipeline_mode = #tpu.pipeline_mode<synchronous>, transform_indices = @transform_1, window_bounds = array<i64: 16, 4>}, {pipeline_mode = #tpu.pipeline_mode<synchronous>, transform_indices = @transform_2, window_bounds = array<i64: 4, 16>}, {transform_indices = @transform_3, window_bounds = array<i64: 1, 6, 16, 16>}]} {
    %c0 = arith.constant 0 : index
    %c0_0 = arith.constant 0 : index
    %0 = vector.load %arg3[%c0, %c0_0] : memref<16x4xbf16, #tpu.memory_space<vmem>>, vector<16x4xbf16>
    %c0_1 = arith.constant 0 : index
    %c0_2 = arith.constant 0 : index
    %1 = vector.load %arg4[%c0_1, %c0_2] : memref<4x16xbf16, #tpu.memory_space<vmem>>, vector<4x16xbf16>
    %c0_3 = arith.constant 0 : index
    %c0_4 = arith.constant 0 : index
    %c0_5 = arith.constant 0 : index
    %c0_6 = arith.constant 0 : index
    %2 = vector.load %arg2[%c0_3, %c0_4, %c0_5, %c0_6] : memref<6x1x4x4xbf16, #tpu.memory_space<vmem>>, vector<1x1x4x4xbf16>
    %3 = vector.shape_cast %2 : vector<1x1x4x4xbf16> to vector<4x4xbf16>
    %cst = arith.constant dense<0.000000e+00> : vector<16x4xf32>
    %4 = tpu.matmul %0, %3, %cst {dimension_numbers = #tpu.dot_dimension_numbers<[1], [0], [0], [1], [0, 0, 1, 1], [], []>} : vector<16x4xbf16>, vector<4x4xbf16>, vector<16x4xf32> -> vector<16x4xf32>
    %5 = arith.truncf %4 : vector<16x4xf32> to vector<16x4xbf16>
    %cst_7 = arith.constant dense<0.000000e+00> : vector<16x16xf32>
    %6 = tpu.matmul %5, %1, %cst_7 {dimension_numbers = #tpu.dot_dimension_numbers<[1], [0], [0], [1], [0, 0, 1, 1], [], []>} : vector<16x4xbf16>, vector<4x16xbf16>, vector<16x16xf32> -> vector<16x16xf32>
    %c0_8 = arith.constant 0 : index
    %c0_9 = arith.constant 0 : index
    %c0_10 = arith.constant 0 : index
    %c0_11 = arith.constant 0 : index
    %7 = vector.load %arg5[%c0_8, %c0_9, %c0_10, %c0_11] : memref<1x6x16x16xf32, #tpu.memory_space<vmem>>, vector<1x1x16x16xf32>
    %8 = vector.shape_cast %7 : vector<1x1x16x16xf32> to vector<16x16xf32>
    %9 = vector.shape_cast %6 : vector<16x16xf32> to vector<1x1x16x16xf32>
    tpu.vector_store %arg5[%c0_8, %c0_9, %c0_10, %c0_11], %9 {strides = array<i32>} : memref<1x6x16x16xf32, #tpu.memory_space<vmem>>, vector<1x1x16x16xf32>,
    %c1 = arith.constant 1 : index
    %c0_12 = arith.constant 0 : index
    %c0_13 = arith.constant 0 : index
    %c0_14 = arith.constant 0 : index
    %10 = vector.load %arg2[%c1, %c0_12, %c0_13, %c0_14] : memref<6x1x4x4xbf16, #tpu.memory_space<vmem>>, vector<1x1x4x4xbf16>
    %11 = vector.shape_cast %10 : vector<1x1x4x4xbf16> to vector<4x4xbf16>
    %cst_15 = arith.constant dense<0.000000e+00> : vector<16x4xf32>
    %12 = tpu.matmul %0, %11, %cst_15 {dimension_numbers = #tpu.dot_dimension_numbers<[1], [0], [0], [1], [0, 0, 1, 1], [], []>} : vector<16x4xbf16>, vector<4x4xbf16>, vector<16x4xf32> -> vector<16x4xf32>
    %13 = arith.truncf %12 : vector<16x4xf32> to vector<16x4xbf16>
    %cst_16 = arith.constant dense<0.000000e+00> : vector<16x16xf32>
    %14 = tpu.matmul %13, %1, %cst_16 {dimension_numbers = #tpu.dot_dimension_numbers<[1], [0], [0], [1], [0, 0, 1, 1], [], []>} : vector<16x4xbf16>, vector<4x16xbf16>, vector<16x16xf32> -> vector<16x16xf32>
    %c0_17 = arith.constant 0 : index
    %c1_18 = arith.constant 1 : index
    %c0_19 = arith.constant 0 : index
    %c0_20 = arith.constant 0 : index
    %15 = vector.load %arg5[%c0_17, %c1_18, %c0_19, %c0_20] : memref<1x6x16x16xf32, #tpu.memory_space<vmem>>, vector<1x1x16x16xf32>
    %16 = vector.shape_cast %15 : vector<1x1x16x16xf32> to vector<16x16xf32>
    %17 = vector.shape_cast %14 : vector<16x16xf32> to vector<1x1x16x16xf32>
    tpu.vector_store %arg5[%c0_17, %c1_18, %c0_19, %c0_20], %17 {strides = array<i32>} : memref<1x6x16x16xf32, #tpu.memory_space<vmem>>, vector<1x1x16x16xf32>,
    %c2 = arith.constant 2 : index
    %c0_21 = arith.constant 0 : index
    %c0_22 = arith.constant 0 : index
    %c0_23 = arith.constant 0 : index
    %18 = vector.load %arg2[%c2, %c0_21, %c0_22, %c0_23] : memref<6x1x4x4xbf16, #tpu.memory_space<vmem>>, vector<1x1x4x4xbf16>
    %19 = vector.shape_cast %18 : vector<1x1x4x4xbf16> to vector<4x4xbf16>
    %cst_24 = arith.constant dense<0.000000e+00> : vector<16x4xf32>
    %20 = tpu.matmul %0, %19, %cst_24 {dimension_numbers = #tpu.dot_dimension_numbers<[1], [0], [0], [1], [0, 0, 1, 1], [], []>} : vector<16x4xbf16>, vector<4x4xbf16>, vector<16x4xf32> -> vector<16x4xf32>
    %21 = arith.truncf %20 : vector<16x4xf32> to vector<16x4xbf16>
    %cst_25 = arith.constant dense<0.000000e+00> : vector<16x16xf32>
    %22 = tpu.matmul %21, %1, %cst_25 {dimension_numbers = #tpu.dot_dimension_numbers<[1], [0], [0], [1], [0, 0, 1, 1], [], []>} : vector<16x4xbf16>, vector<4x16xbf16>, vector<16x16xf32> -> vector<16x16xf32>
    %c0_26 = arith.constant 0 : index
    %c2_27 = arith.constant 2 : index
    %c0_28 = arith.constant 0 : index
    %c0_29 = arith.constant 0 : index
    %23 = vector.load %arg5[%c0_26, %c2_27, %c0_28, %c0_29] : memref<1x6x16x16xf32, #tpu.memory_space<vmem>>, vector<1x1x16x16xf32>
    %24 = vector.shape_cast %23 : vector<1x1x16x16xf32> to vector<16x16xf32>
    %25 = vector.shape_cast %22 : vector<16x16xf32> to vector<1x1x16x16xf32>
    tpu.vector_store %arg5[%c0_26, %c2_27, %c0_28, %c0_29], %25 {strides = array<i32>} : memref<1x6x16x16xf32, #tpu.memory_space<vmem>>, vector<1x1x16x16xf32>,
    %c3 = arith.constant 3 : index
    %c0_30 = arith.constant 0 : index
    %c0_31 = arith.constant 0 : index
    %c0_32 = arith.constant 0 : index
    %26 = vector.load %arg2[%c3, %c0_30, %c0_31, %c0_32] : memref<6x1x4x4xbf16, #tpu.memory_space<vmem>>, vector<1x1x4x4xbf16>
    %27 = vector.shape_cast %26 : vector<1x1x4x4xbf16> to vector<4x4xbf16>
    %cst_33 = arith.constant dense<0.000000e+00> : vector<16x4xf32>
    %28 = tpu.matmul %0, %27, %cst_33 {dimension_numbers = #tpu.dot_dimension_numbers<[1], [0], [0], [1], [0, 0, 1, 1], [], []>} : vector<16x4xbf16>, vector<4x4xbf16>, vector<16x4xf32> -> vector<16x4xf32>
    %29 = arith.truncf %28 : vector<16x4xf32> to vector<16x4xbf16>
    %cst_34 = arith.constant dense<0.000000e+00> : vector<16x16xf32>
    %30 = tpu.matmul %29, %1, %cst_34 {dimension_numbers = #tpu.dot_dimension_numbers<[1], [0], [0], [1], [0, 0, 1, 1], [], []>} : vector<16x4xbf16>, vector<4x16xbf16>, vector<16x16xf32> -> vector<16x16xf32>
    %c0_35 = arith.constant 0 : index
    %c3_36 = arith.constant 3 : index
    %c0_37 = arith.constant 0 : index
    %c0_38 = arith.constant 0 : index
    %31 = vector.load %arg5[%c0_35, %c3_36, %c0_37, %c0_38] : memref<1x6x16x16xf32, #tpu.memory_space<vmem>>, vector<1x1x16x16xf32>
    %32 = vector.shape_cast %31 : vector<1x1x16x16xf32> to vector<16x16xf32>
    %33 = vector.shape_cast %30 : vector<16x16xf32> to vector<1x1x16x16xf32>
    tpu.vector_store %arg5[%c0_35, %c3_36, %c0_37, %c0_38], %33 {strides = array<i32>} : memref<1x6x16x16xf32, #tpu.memory_space<vmem>>, vector<1x1x16x16xf32>,
    %c4 = arith.constant 4 : index
    %c0_39 = arith.constant 0 : index
    %c0_40 = arith.constant 0 : index
    %c0_41 = arith.constant 0 : index
    %34 = vector.load %arg2[%c4, %c0_39, %c0_40, %c0_41] : memref<6x1x4x4xbf16, #tpu.memory_space<vmem>>, vector<1x1x4x4xbf16>
    %35 = vector.shape_cast %34 : vector<1x1x4x4xbf16> to vector<4x4xbf16>
    %cst_42 = arith.constant dense<0.000000e+00> : vector<16x4xf32>
    %36 = tpu.matmul %0, %35, %cst_42 {dimension_numbers = #tpu.dot_dimension_numbers<[1], [0], [0], [1], [0, 0, 1, 1], [], []>} : vector<16x4xbf16>, vector<4x4xbf16>, vector<16x4xf32> -> vector<16x4xf32>
    %37 = arith.truncf %36 : vector<16x4xf32> to vector<16x4xbf16>
    %cst_43 = arith.constant dense<0.000000e+00> : vector<16x16xf32>
    %38 = tpu.matmul %37, %1, %cst_43 {dimension_numbers = #tpu.dot_dimension_numbers<[1], [0], [0], [1], [0, 0, 1, 1], [], []>} : vector<16x4xbf16>, vector<4x16xbf16>, vector<16x16xf32> -> vector<16x16xf32>
    %c0_44 = arith.constant 0 : index
    %c4_45 = arith.constant 4 : index
    %c0_46 = arith.constant 0 : index
    %c0_47 = arith.constant 0 : index
    %39 = vector.load %arg5[%c0_44, %c4_45, %c0_46, %c0_47] : memref<1x6x16x16xf32, #tpu.memory_space<vmem>>, vector<1x1x16x16xf32>
    %40 = vector.shape_cast %39 : vector<1x1x16x16xf32> to vector<16x16xf32>
    %41 = vector.shape_cast %38 : vector<16x16xf32> to vector<1x1x16x16xf32>
    tpu.vector_store %arg5[%c0_44, %c4_45, %c0_46, %c0_47], %41 {strides = array<i32>} : memref<1x6x16x16xf32, #tpu.memory_space<vmem>>, vector<1x1x16x16xf32>,
    %c5 = arith.constant 5 : index
    %c0_48 = arith.constant 0 : index
    %c0_49 = arith.constant 0 : index
    %c0_50 = arith.constant 0 : index
    %42 = vector.load %arg2[%c5, %c0_48, %c0_49, %c0_50] : memref<6x1x4x4xbf16, #tpu.memory_space<vmem>>, vector<1x1x4x4xbf16>
    %43 = vector.shape_cast %42 : vector<1x1x4x4xbf16> to vector<4x4xbf16>
    %cst_51 = arith.constant dense<0.000000e+00> : vector<16x4xf32>
    %44 = tpu.matmul %0, %43, %cst_51 {dimension_numbers = #tpu.dot_dimension_numbers<[1], [0], [0], [1], [0, 0, 1, 1], [], []>} : vector<16x4xbf16>, vector<4x4xbf16>, vector<16x4xf32> -> vector<16x4xf32>
    %45 = arith.truncf %44 : vector<16x4xf32> to vector<16x4xbf16>
    %cst_52 = arith.constant dense<0.000000e+00> : vector<16x16xf32>
    %46 = tpu.matmul %45, %1, %cst_52 {dimension_numbers = #tpu.dot_dimension_numbers<[1], [0], [0], [1], [0, 0, 1, 1], [], []>} : vector<16x4xbf16>, vector<4x16xbf16>, vector<16x16xf32> -> vector<16x16xf32>
    %c0_53 = arith.constant 0 : index
    %c5_54 = arith.constant 5 : index
    %c0_55 = arith.constant 0 : index
    %c0_56 = arith.constant 0 : index
    %47 = vector.load %arg5[%c0_53, %c5_54, %c0_55, %c0_56] : memref<1x6x16x16xf32, #tpu.memory_space<vmem>>, vector<1x1x16x16xf32>
    %48 = vector.shape_cast %47 : vector<1x1x16x16xf32> to vector<16x16xf32>
    %49 = vector.shape_cast %46 : vector<16x16xf32> to vector<1x1x16x16xf32>
    tpu.vector_store %arg5[%c0_53, %c5_54, %c0_55, %c0_56], %49 {strides = array<i32>} : memref<1x6x16x16xf32, #tpu.memory_space<vmem>>, vector<1x1x16x16xf32>,
    return
  }
  func.func @transform_0(%arg0: i32, %arg1: i32) -> (i32, i32, i32, i32) {
    %c0_i32 = arith.constant 0 : i32
    %c0_i32_0 = arith.constant 0 : i32
    %c0_i32_1 = arith.constant 0 : i32
    return %arg1, %arg0, %c0_i32, %c0_i32_0 : i32, i32, i32, i32
  }
  func.func @transform_1(%arg0: i32, %arg1: i32) -> (i32, i32) {
    %c0_i32 = arith.constant 0 : i32
    %c0_i32_0 = arith.constant 0 : i32
    %c0_i32_1 = arith.constant 0 : i32
    return %c0_i32, %c0_i32_0 : i32, i32
  }
  func.func @transform_2(%arg0: i32, %arg1: i32) -> (i32, i32) {
    %c0_i32 = arith.constant 0 : i32
    %c0_i32_0 = arith.constant 0 : i32
    %c0_i32_1 = arith.constant 0 : i32
    return %c0_i32, %c0_i32_0 : i32, i32
  }
  func.func @transform_3(%arg0: i32, %arg1: i32) -> (i32, i32, i32, i32) {
    %c0_i32 = arith.constant 0 : i32
    %c0_i32_0 = arith.constant 0 : i32
    %c0_i32_1 = arith.constant 0 : i32
    return %arg0, %arg1, %c0_i32, %c0_i32_0 : i32, i32, i32, i32
  }
}

</mosaic_0001>

<llo_original>
// kernel: incremental_segmentation_forward.3
$region0: #{incremental_segmentation_forward.3}
  #allocation0 [shape = 'u32[]', space=smem, size = 0x4, offset = 0x4, fixed_abs, tag = 'smem constant byte address 0x4 - core index']
  #allocation1 [shape = 'u32[144,128]{1,0:T(1,128)}', space=vmem, size = 0x12000, scoped, tag = 'internal scratch']
  %s0 = inlined_call_operand.vmem [shape: bf16[6,2,4,4], index: 0, kind: input, shape index: {}]
  %s1 = inlined_call_operand.vmem [shape: bf16[16,4], index: 1, kind: input, shape index: {}]
  %s2 = inlined_call_operand.vmem [shape: bf16[4,16], index: 2, kind: input, shape index: {}]
  %s3 = inlined_call_operand.hbm [shape: f32[2,6,16,16], index: 3, kind: output, shape index: {}]
  %s4 = sld [smem:[#allocation0]]
  $region86: #{incremental_segmentation_forward.3} parent=0
    _
  %s6 = ssub.s32 1, %s4
  %s7 = scalar_select 0, %s6, %s4
  $region1: #{incremental_segmentation_forward.3} parent=0
    #allocation2 [shape = 'u8[12288]{0}', space=vmem, size = 0x3000, scoped, tag = 'input window, operand 0']
    #allocation3 [shape = 'u8[98304]{0}', space=vmem, size = 0x18000, scoped, tag = 'output window, operand 0']
    #allocation4 [shape = 's32[2]{0}', space=sflag, size = 0x8, scoped, tag = 'scoped memory for incremental_segmentation_forward.3']
    %8 = vsyncpa [#allocation4], 0
    %s9 = scalar_lea.sflag [#allocation4], 1
    %10 = vsyncpa %s9, 0
    loop: start=0, step=1, limit=4
    $region2: #{incremental_segmentation_forward.3} parent=1 // loop_pre_header
      _
    $region3: #{incremental_segmentation_forward.3} parent=1 // loop_header
      %s12 = sphi 0, %s16
      %p13 = scmp.ge.s32.totalorder %s12, 4
      %s19 = sphi 0, %s31
      %s20 = sphi 0, %s27
      %s21 = sphi 0, %s19
      %s22 = sphi 0, %s20
      %s23 = sphi 0, %s21
      %s24 = sphi 0, %s22
      %s36 = sphi 0, %s38
      %s39 = sphi 0, %s36
      %s40 = sphi 0, %s39
      %s56 = sphi 0, %s40
      %s60 = sphi 0, %s60
      %s62 = sphi 0, %s60
      %s63 = sphi 0, %s62
      %s77 = sphi 0, %s63
      %s81 = sphi 0, %s81
      %s83 = sphi 0, %s81
      %s84 = sphi 0, %s83
      %s98 = sphi 0, %s84
      %s106 = sphi 0, %s108
      %s109 = sphi 0, %s106
      %s110 = sphi 0, %s109
      %s126 = sphi 0, %s110
    $region4: #{incremental_segmentation_forward.3} parent=1 // loop_header_branch
      %15 = sbr.rel (%p13) target = $region8
    $region5: #{incremental_segmentation_forward.3} parent=1 // loop_body
      %s17 = ssub.s32 %s12, 1
      %s18 = ssub.s32 %s12, 2
      %s25 = sadd.s32 1, %s20
      %p26 = scmp.ge.s32.totalorder %s25, 1
      %s27 = scalar_select %p26, 0, %s25
      %s28 = sadd.s32 1, %s19
      %s29 = scalar_select %p26, %s28, %s19
      %p30 = scmp.ge.s32.totalorder %s29, 2
      %s31 = scalar_select %p30, 0, %s29
      %s32 = ssub.s32 %s20, %s27
      %s33 = ssub.s32 %s19, %s31
      %s34 = sor.u32 %s32, %s33
      %p35 = scmp.eq.s32.totalorder %s34, 0
      %s37 = sadd.s32 %s36, 1
      %s38 = scalar_select %p35, %s36, %s37
      %p41 = pneg %p35
      %p42 = scmp.eq.s32.totalorder %s12, 1
      %p43 = por %p41, %p42
      %p44 = scmp.ne.s32.totalorder %s36, %s39
      %p45 = scmp.eq.s32.totalorder %s12, 0
      %p46 = por %p44, %p45
      %p47 = scmp.ne.s32.totalorder %s36, %s39
      %p48 = scmp.eq.s32.totalorder %s17, 1
      %p49 = por %p47, %p48
      %p50 = scmp.ne.s32.totalorder %s39, %s40
      %p51 = scmp.eq.s32.totalorder %s17, 0
      %p52 = por %p50, %p51
      %p53 = scmp.ne.s32.totalorder %s39, %s40
      %p54 = scmp.eq.s32.totalorder %s18, 1
      %p55 = por %p53, %p54
      %p57 = scmp.ne.s32.totalorder %s40, %s56
      %p58 = scmp.eq.s32.totalorder %s18, 0
      %p59 = por %p57, %p58
      %s61 = sadd.s32 %s60, 1
      %p64 = scmp.eq.s32.totalorder %s12, 1
      %p65 = scmp.ne.s32.totalorder %s60, %s62
      %p66 = scmp.eq.s32.totalorder %s12, 0
      %p67 = por %p65, %p66
      %p68 = scmp.ne.s32.totalorder %s60, %s62
      %p69 = scmp.eq.s32.totalorder %s17, 1
      %p70 = por %p68, %p69
      %p71 = scmp.ne.s32.totalorder %s62, %s63
      %p72 = scmp.eq.s32.totalorder %s17, 0
      %p73 = por %p71, %p72
      %p74 = scmp.ne.s32.totalorder %s62, %s63
      %p75 = scmp.eq.s32.totalorder %s18, 1
      %p76 = por %p74, %p75
      %p78 = scmp.ne.s32.totalorder %s63, %s77
      %p79 = scmp.eq.s32.totalorder %s18, 0
      %p80 = por %p78, %p79
      %s82 = sadd.s32 %s81, 1
      %p85 = scmp.eq.s32.totalorder %s12, 1
      %p86 = scmp.ne.s32.totalorder %s81, %s83
      %p87 = scmp.eq.s32.totalorder %s12, 0
      %p88 = por %p86, %p87
      %p89 = scmp.ne.s32.totalorder %s81, %s83
      %p90 = scmp.eq.s32.totalorder %s17, 1
      %p91 = por %p89, %p90
      %p92 = scmp.ne.s32.totalorder %s83, %s84
      %p93 = scmp.eq.s32.totalorder %s17, 0
      %p94 = por %p92, %p93
      %p95 = scmp.ne.s32.totalorder %s83, %s84
      %p96 = scmp.eq.s32.totalorder %s18, 1
      %p97 = por %p95, %p96
      %p99 = scmp.ne.s32.totalorder %s84, %s98
      %p100 = scmp.eq.s32.totalorder %s18, 0
      %p101 = por %p99, %p100
      %s102 = ssub.s32 %s19, %s31
      %s103 = ssub.s32 %s20, %s27
      %s104 = sor.u32 %s102, %s103
      %p105 = scmp.eq.s32.totalorder %s104, 0
      %s107 = sadd.s32 %s106, 1
      %s108 = scalar_select %p105, %s106, %s107
      %p111 = pneg %p105
      %p112 = scmp.eq.s32.totalorder %s12, 1
      %p113 = por %p111, %p112
      %p114 = scmp.ne.s32.totalorder %s106, %s109
      %p115 = scmp.eq.s32.totalorder %s12, 0
      %p116 = por %p114, %p115
      %p117 = scmp.ne.s32.totalorder %s106, %s109
      %p118 = scmp.eq.s32.totalorder %s17, 1
      %p119 = por %p117, %p118
      %p120 = scmp.ne.s32.totalorder %s109, %s110
      %p121 = scmp.eq.s32.totalorder %s17, 0
      %p122 = por %p120, %p121
      %p123 = scmp.ne.s32.totalorder %s109, %s110
      %p124 = scmp.eq.s32.totalorder %s18, 1
      %p125 = por %p123, %p124
      %p127 = scmp.ne.s32.totalorder %s110, %s126
      %p128 = scmp.eq.s32.totalorder %s18, 0
      %p129 = por %p127, %p128
      %p130 = scmp.le.s32.totalorder 1, %s12
      %p131 = scmp.lt.s32.totalorder %s12, 3
      %p132 = pnand %p130, %p131
      %p133 = pneg %p132
      // Predicated region
      $region9: #{incremental_segmentation_forward.3} parent=5 // pred_check
        _
      $region10: #{incremental_segmentation_forward.3} parent=5 // pred_check_branch
        %135 = sbr.rel (%p132) target = $region12
      $region11: #{incremental_segmentation_forward.3} parent=5 // pred_region
        %s136 = ssub.s32 %s12, 1
        // Predicated region
        $region13: #{incremental_segmentation_forward.3} parent=11 // pred_check
          %p137 = pneg %p73
        $region14: #{incremental_segmentation_forward.3} parent=11 // pred_check_branch
          %139 = sbr.rel (%p137) target = $region16
        $region15: #{incremental_segmentation_forward.3} parent=11 // pred_region
          _
        $region16: #{incremental_segmentation_forward.3} parent=11 // pred_fallthru
          _
        // Predicated region
        $region17: #{incremental_segmentation_forward.3} parent=11 // pred_check
          %p140 = pneg %p94
        $region18: #{incremental_segmentation_forward.3} parent=11 // pred_check_branch
          %142 = sbr.rel (%p140) target = $region20
        $region19: #{incremental_segmentation_forward.3} parent=11 // pred_region
          _
        $region20: #{incremental_segmentation_forward.3} parent=11 // pred_fallthru
          _
      $region12: #{incremental_segmentation_forward.3} parent=5 // pred_fallthru
        _
      %p143 = scmp.lt.s32.totalorder %s12, 2
      // Predicated region
      $region21: #{incremental_segmentation_forward.3} parent=5 // pred_check
        %p144 = pneg %p143
      $region22: #{incremental_segmentation_forward.3} parent=5 // pred_check_branch
        %146 = sbr.rel (%p144) target = $region24
      $region23: #{incremental_segmentation_forward.3} parent=5 // pred_region
        // Predicated region
        $region25: #{incremental_segmentation_forward.3} parent=23 // pred_check
          %p147 = pneg %p46
        $region26: #{incremental_segmentation_forward.3} parent=23 // pred_check_branch
          %149 = sbr.rel (%p147) target = $region28
        $region27: #{incremental_segmentation_forward.3} parent=23 // pred_region
          %s150 = sand.u32 %s36, 1
          %s151 = sand.u32 %s36, 1
          %s152 = smul.addr %s151, 12
          %s153 = scalar_lea.vmem [#allocation2], %s152
          %s154 = smul.u32 6, %s20
          %s155 = smul.addr %s154, 2
          %s156 = sadd.s32 %s19, %s155
          %s157 = smul.addr %s156, 2
          %s158 = scalar_lea.vmem %s0, %s157
          // Predicated region
          $region29: #{incremental_segmentation_forward.3} parent=27 // pred_check
            _
          $region30: #{incremental_segmentation_forward.3} parent=27 // pred_check_branch
            %160 = sbr.rel (0) target = $region32
          $region31: #{incremental_segmentation_forward.3} parent=27 // pred_region
            // Predicated region
            $region33: #{incremental_segmentation_forward.3} parent=31 // pred_check
              _
            $region34: #{incremental_segmentation_forward.3} parent=31 // pred_check_branch
              %162 = sbr.rel target = $region36
            $region35: #{incremental_segmentation_forward.3} parent=31 // pred_region
              // Predicated region
              $region48: #{incremental_segmentation_forward.3} parent=35 // pred_check
                _
              $region49: #{incremental_segmentation_forward.3} parent=35 // pred_check_branch
                %187 = sbr.rel (0) target = $region51
              $region50: #{incremental_segmentation_forward.3} parent=35 // pred_region
                loop: start=0, step=1, limit=1
                $region52: #{incremental_segmentation_forward.3} parent=50 // loop_pre_header
                  _
                $region53: #{incremental_segmentation_forward.3} parent=50 // loop_header
                  %s189 = sphi 0, %s193
                  %p190 = scmp.ge.s32.totalorder %s189, 1
                  %s194 = sphi %s158, %s158
                  %s195 = sphi %s153, %s153
                $region54: #{incremental_segmentation_forward.3} parent=50 // loop_header_branch
                  %192 = sbr.rel (%p190) target = $region58
                $region55: #{incremental_segmentation_forward.3} parent=50 // loop_body
                  _
                $region56: #{incremental_segmentation_forward.3} parent=50 // loop_footer
                  %s193 = sadd.s32 1, %s189
                $region57: #{incremental_segmentation_forward.3} parent=50 // loop_footer_branch
                  %188 = sbr.rel target = $region53
                $region58: #{incremental_segmentation_forward.3} parent=50 // loop_exit
                  _
                loop: start=0, step=1, limit=1
                $region59: #{incremental_segmentation_forward.3} parent=50 // loop_pre_header
                  _
                $region60: #{incremental_segmentation_forward.3} parent=50 // loop_header
                  %s198 = sphi 0, %s202
                  %p199 = scmp.ge.s32.totalorder %s198, 1
                  %s203 = sphi %s158, %s158
                  %s204 = sphi %s153, %s153
                $region61: #{incremental_segmentation_forward.3} parent=50 // loop_header_branch
                  %201 = sbr.rel (%p199) target = $region65
                $region62: #{incremental_segmentation_forward.3} parent=50 // loop_body
                  %v205 = vld [vmem:[%s203] sm:$0x3]
                  %206 = vst [vmem:[%s204] sm:$0x3] %v205
                  %v207 = vld [vmem:[%s203 + $0x4] sm:$0x3]
                  %208 = vst [vmem:[%s204 + $0x2] sm:$0x3] %v207
                  %v209 = vld [vmem:[%s203 + $0x8] sm:$0x3]
                  %210 = vst [vmem:[%s204 + $0x4] sm:$0x3] %v209
                  %v211 = vld [vmem:[%s203 + $0xc] sm:$0x3]
                  %212 = vst [vmem:[%s204 + $0x6] sm:$0x3] %v211
                  %v213 = vld [vmem:[%s203 + $0x10] sm:$0x3]
                  %214 = vst [vmem:[%s204 + $0x8] sm:$0x3] %v213
                  %v215 = vld [vmem:[%s203 + $0x14] sm:$0x3]
                  %216 = vst [vmem:[%s204 + $0xa] sm:$0x3] %v215
                $region63: #{incremental_segmentation_forward.3} parent=50 // loop_footer
                  %s202 = sadd.s32 1, %s198
                $region64: #{incremental_segmentation_forward.3} parent=50 // loop_footer_branch
                  %197 = sbr.rel target = $region60
                $region65: #{incremental_segmentation_forward.3} parent=50 // loop_exit
                  _
              $region51: #{incremental_segmentation_forward.3} parent=35 // pred_fallthru
                _
            $region36: #{incremental_segmentation_forward.3} parent=31 // pred_fallthru
              _
            // Predicated region
            $region37: #{incremental_segmentation_forward.3} parent=31 // pred_check
              _
            $region38: #{incremental_segmentation_forward.3} parent=31 // pred_check_branch
              %164 = sbr.rel (0) target = $region40
            $region39: #{incremental_segmentation_forward.3} parent=31 // pred_region
              loop: start=0, step=1, limit=1
              $region41: #{incremental_segmentation_forward.3} parent=39 // loop_pre_header
                _
              $region42: #{incremental_segmentation_forward.3} parent=39 // loop_header
                %s167 = sphi 0, %s171
                %p168 = scmp.ge.s32.totalorder %s167, 1
                %s172 = sphi %s158, %s158
                %s173 = sphi %s153, %s153
              $region43: #{incremental_segmentation_forward.3} parent=39 // loop_header_branch
                %170 = sbr.rel (%p168) target = $region47
              $region44: #{incremental_segmentation_forward.3} parent=39 // loop_body
                %v174 = vld [vmem:[%s172] sm:$0x3]
                %175 = vst [vmem:[%s173] sm:$0x3] %v174
                %v176 = vld [vmem:[%s172 + $0x4] sm:$0x3]
                %177 = vst [vmem:[%s173 + $0x2] sm:$0x3] %v176
                %v178 = vld [vmem:[%s172 + $0x8] sm:$0x3]
                %179 = vst [vmem:[%s173 + $0x4] sm:$0x3] %v178
                %v180 = vld [vmem:[%s172 + $0xc] sm:$0x3]
                %181 = vst [vmem:[%s173 + $0x6] sm:$0x3] %v180
                %v182 = vld [vmem:[%s172 + $0x10] sm:$0x3]
                %183 = vst [vmem:[%s173 + $0x8] sm:$0x3] %v182
                %v184 = vld [vmem:[%s172 + $0x14] sm:$0x3]
                %185 = vst [vmem:[%s173 + $0xa] sm:$0x3] %v184
              $region45: #{incremental_segmentation_forward.3} parent=39 // loop_footer
                %s171 = sadd.s32 1, %s167
              $region46: #{incremental_segmentation_forward.3} parent=39 // loop_footer_branch
                %166 = sbr.rel target = $region42
              $region47: #{incremental_segmentation_forward.3} parent=39 // loop_exit
                _
            $region40: #{incremental_segmentation_forward.3} parent=31 // pred_fallthru
              _
          $region32: #{incremental_segmentation_forward.3} parent=27 // pred_fallthru
            _
          %217 = vnop
        $region28: #{incremental_segmentation_forward.3} parent=23 // pred_fallthru
          _
      $region24: #{incremental_segmentation_forward.3} parent=5 // pred_fallthru
        _
      %p218 = scmp.le.s32.totalorder 1, %s12
      %p219 = scmp.lt.s32.totalorder %s12, 3
      %p220 = pnand %p218, %p219
      %p221 = pneg %p220
      // Predicated region
      $region66: #{incremental_segmentation_forward.3} parent=5 // pred_check
        _
      $region67: #{incremental_segmentation_forward.3} parent=5 // pred_check_branch
        %223 = sbr.rel (%p220) target = $region69
      $region68: #{incremental_segmentation_forward.3} parent=5 // pred_region
        %s224 = ssub.s32 %s12, 1
        %s225 = sand.u32 %s39, 1
        %s226 = sand.u32 %s39, 1
        %s227 = smul.addr %s226, 12
        %s228 = scalar_lea.vmem [#allocation2], %s227
        // Predicated region
        $region70: #{incremental_segmentation_forward.3} parent=68 // pred_check
          %p229 = pneg %p52
        $region71: #{incremental_segmentation_forward.3} parent=68 // pred_check_branch
          %231 = sbr.rel (%p229) target = $region73
        $region72: #{incremental_segmentation_forward.3} parent=68 // pred_region
          _
        $region73: #{incremental_segmentation_forward.3} parent=68 // pred_fallthru
          _
        %s232 = sand.u32 %s39, 1
        %s233 = sand.u32 %s39, 1
        %s234 = smul.addr %s233, 12
        %s235 = scalar_lea.vmem [#allocation2], %s234
        %p236 = pneg %p52
        %p237 = pneg %p49
        %p238 = pneg %p73
        %p239 = pneg %p70
        %p240 = pneg %p94
        %p241 = pneg %p91
        %p242 = pneg %p122
        %p243 = pneg %p119
        %s244 = sand.u32 %s109, 1
        %s245 = scalar_lea.sflag [#allocation4], %s244
        %s246 = sand.u32 %s109, 1
        %s247 = smul.addr %s246, 96
        %s248 = scalar_lea.vmem [#allocation3], %s247
        %s249 = smul.u32 6, %s22
        %s250 = smul.u32 6, %s22
        %v252 = vld [vmem:[%s1] sm:$0xf]
        %v253 = vld [vmem:[%s1 + $0x4] sm:$0xf]
        %v254 = vld [vmem:[%s2] sm:$0x3]
        %v255 = vld [vmem:[%s228] sm:$0x3]
        %v258 = vunpack.c.l.b16 %v252
        %v259 = vunpack.c.l.b16 %v253
        %v260 = vpack.c.b16 %v259, %v258
        %vm261 = vcmask 31744
        %v263 = vsel %vm261, %v260, 0
        %vm265 = vcmask 1041408
        %v267 = vsel %vm265, %v255, 0
        %269 = vmatprep.subr.bf16.mxu0 0
        %270 = vmatpush1.bf16.msra.mxu0 %v267
        %271 = vmatprep.subr.bf16.mxu0 0
        %272 = vmatpush1.bf16.msra.mxu0 0
        %273 = vmatprep.subr.bf16.mxu0 0
        %274 = vmatpush1.bf16.msra.mxu0 0
        %275 = vmatprep.subr.bf16.mxu0 0
        %276 = vmatpush1.bf16.msra.mxu0 0
        %277 = vmatprep.subr.bf16.mxu0 0
        %278 = vmatpush1.bf16.msra.mxu0 0
        %279 = vmatprep.subr.bf16.mxu0 0
        %280 = vmatpush1.bf16.msra.mxu0 0
        %281 = vmatprep.subr.bf16.mxu0 0
        %282 = vmatpush1.bf16.msra.mxu0 0
        %283 = vmatprep.subr.bf16.mxu0 0
        %284 = vmatpush1.bf16.msra.mxu0 0
        %285 = vmatprep.subr.bf16.mxu0 0
        %286 = vmatpush1.bf16.msra.mxu0 0
        %287 = vmatprep.subr.bf16.mxu0 0
        %288 = vmatpush1.bf16.msra.mxu0 0
        %289 = vmatprep.subr.bf16.mxu0 0
        %290 = vmatpush1.bf16.msra.mxu0 0
        %291 = vmatprep.subr.bf16.mxu0 0
        %292 = vmatpush1.bf16.msra.mxu0 0
        %293 = vmatprep.subr.bf16.mxu0 0
        %294 = vmatpush1.bf16.msra.mxu0 0
        %295 = vmatprep.subr.bf16.mxu0 0
        %296 = vmatpush1.bf16.msra.mxu0 0
        %297 = vmatprep.subr.bf16.mxu0 0
        %298 = vmatpush1.bf16.msra.mxu0 0
        %299 = vmatprep.subr.bf16.mxu0 0
        %300 = vmatpush1.bf16.msra.mxu0 0
        %301 = vmatprep.mubr.bf16.mxu0 0
        %302 = vmatmul.mubr.bf16.gmra.mrb[0].mxu0 %v263
        %v303 = vpop.f32.mrb[0].mxu0
        %v304 = vadd.f32 0.0, %v303
        %v305 = vpop.f32.mrb[0].mxu0
        %v306 = vpop.f32.mrb[0].mxu0
        %v307 = vadd.f32 0.0, %v306
        %v308 = vpop.f32.mrb[0].mxu0
        %309 = vdwg.mxu0
        %v310 = vpack.c.bf16 %v307, %v304
        %v312 = vsel %vm261, %v310, 0
        %v315 = vsel %vm265, %v254, 0
        %317 = vmatprep.subr.bf16.mxu0 0
        %318 = vmatpush1.bf16.msra.mxu0 %v315
        %319 = vmatprep.subr.bf16.mxu0 0
        %320 = vmatpush1.bf16.msra.mxu0 0
        %321 = vmatprep.subr.bf16.mxu0 0
        %322 = vmatpush1.bf16.msra.mxu0 0
        %323 = vmatprep.subr.bf16.mxu0 0
        %324 = vmatpush1.bf16.msra.mxu0 0
        %325 = vmatprep.subr.bf16.mxu0 0
        %326 = vmatpush1.bf16.msra.mxu0 0
        %327 = vmatprep.subr.bf16.mxu0 0
        %328 = vmatpush1.bf16.msra.mxu0 0
        %329 = vmatprep.subr.bf16.mxu0 0
        %330 = vmatpush1.bf16.msra.mxu0 0
        %331 = vmatprep.subr.bf16.mxu0 0
        %332 = vmatpush1.bf16.msra.mxu0 0
        %333 = vmatprep.subr.bf16.mxu0 0
        %334 = vmatpush1.bf16.msra.mxu0 0
        %335 = vmatprep.subr.bf16.mxu0 0
        %336 = vmatpush1.bf16.msra.mxu0 0
        %337 = vmatprep.subr.bf16.mxu0 0
        %338 = vmatpush1.bf16.msra.mxu0 0
        %339 = vmatprep.subr.bf16.mxu0 0
        %340 = vmatpush1.bf16.msra.mxu0 0
        %341 = vmatprep.subr.bf16.mxu0 0
        %342 = vmatpush1.bf16.msra.mxu0 0
        %343 = vmatprep.subr.bf16.mxu0 0
        %344 = vmatpush1.bf16.msra.mxu0 0
        %345 = vmatprep.subr.bf16.mxu0 0
        %346 = vmatpush1.bf16.msra.mxu0 0
        %347 = vmatprep.subr.bf16.mxu0 0
        %348 = vmatpush1.bf16.msra.mxu0 0
        %349 = vmatprep.mubr.bf16.mxu0 0
        %350 = vmatmul.mubr.bf16.gmra.mrb[0].mxu0 %v312
        %v351 = vpop.f32.mrb[0].mxu0
        %v352 = vadd.f32 0.0, %v351
        %v353 = vpop.f32.mrb[0].mxu0
        %v354 = vpop.f32.mrb[0].mxu0
        %v355 = vadd.f32 0.0, %v354
        %v356 = vpop.f32.mrb[0].mxu0
        %357 = vdwg.mxu0
        %vm358 = vcmask 130048
        %359 = vst.msk [vmem:[%s248] sm:$0xff] %vm358, %v352
        %360 = vst.msk [vmem:[%s248 + $0x8] sm:$0xff] %vm358, %v355
        %s361 = scalar_lea.vmem %s228, 2 [#allocation2]
        %v362 = vld [vmem:[%s361] sm:$0x3]
        %v364 = vsel %vm265, %v362, 0
        %366 = vmatprep.subr.bf16.mxu0 0
        %367 = vmatpush1.bf16.msra.mxu0 %v364
        %368 = vmatprep.subr.bf16.mxu0 0
        %369 = vmatpush1.bf16.msra.mxu0 0
        %370 = vmatprep.subr.bf16.mxu0 0
        %371 = vmatpush1.bf16.msra.mxu0 0
        %372 = vmatprep.subr.bf16.mxu0 0
        %373 = vmatpush1.bf16.msra.mxu0 0
        %374 = vmatprep.subr.bf16.mxu0 0
        %375 = vmatpush1.bf16.msra.mxu0 0
        %376 = vmatprep.subr.bf16.mxu0 0
        %377 = vmatpush1.bf16.msra.mxu0 0
        %378 = vmatprep.subr.bf16.mxu0 0
        %379 = vmatpush1.bf16.msra.mxu0 0
        %380 = vmatprep.subr.bf16.mxu0 0
        %381 = vmatpush1.bf16.msra.mxu0 0
        %382 = vmatprep.subr.bf16.mxu0 0
        %383 = vmatpush1.bf16.msra.mxu0 0
        %384 = vmatprep.subr.bf16.mxu0 0
        %385 = vmatpush1.bf16.msra.mxu0 0
        %386 = vmatprep.subr.bf16.mxu0 0
        %387 = vmatpush1.bf16.msra.mxu0 0
        %388 = vmatprep.subr.bf16.mxu0 0
        %389 = vmatpush1.bf16.msra.mxu0 0
        %390 = vmatprep.subr.bf16.mxu0 0
        %391 = vmatpush1.bf16.msra.mxu0 0
        %392 = vmatprep.subr.bf16.mxu0 0
        %393 = vmatpush1.bf16.msra.mxu0 0
        %394 = vmatprep.subr.bf16.mxu0 0
        %395 = vmatpush1.bf16.msra.mxu0 0
        %396 = vmatprep.subr.bf16.mxu0 0
        %397 = vmatpush1.bf16.msra.mxu0 0
        %398 = vmatprep.mubr.bf16.mxu0 0
        %399 = vmatmul.mubr.bf16.gmra.mrb[0].mxu0 %v263
        %v400 = vpop.f32.mrb[0].mxu0
        %v401 = vadd.f32 0.0, %v400
        %v402 = vpop.f32.mrb[0].mxu0
        %v403 = vpop.f32.mrb[0].mxu0
        %v404 = vadd.f32 0.0, %v403
        %v405 = vpop.f32.mrb[0].mxu0
        %406 = vdwg.mxu0
        %v407 = vpack.c.bf16 %v404, %v401
        %v409 = vsel %vm261, %v407, 0
        %411 = vmatprep.subr.bf16.mxu0 0
        %412 = vmatpush1.bf16.msra.mxu0 %v315
        %413 = vmatprep.subr.bf16.mxu0 0
        %414 = vmatpush1.bf16.msra.mxu0 0
        %415 = vmatprep.subr.bf16.mxu0 0
        %416 = vmatpush1.bf16.msra.mxu0 0
        %417 = vmatprep.subr.bf16.mxu0 0
        %418 = vmatpush1.bf16.msra.mxu0 0
        %419 = vmatprep.subr.bf16.mxu0 0
        %420 = vmatpush1.bf16.msra.mxu0 0
        %421 = vmatprep.subr.bf16.mxu0 0
        %422 = vmatpush1.bf16.msra.mxu0 0
        %423 = vmatprep.subr.bf16.mxu0 0
        %424 = vmatpush1.bf16.msra.mxu0 0
        %425 = vmatprep.subr.bf16.mxu0 0
        %426 = vmatpush1.bf16.msra.mxu0 0
        %427 = vmatprep.subr.bf16.mxu0 0
        %428 = vmatpush1.bf16.msra.mxu0 0
        %429 = vmatprep.subr.bf16.mxu0 0
        %430 = vmatpush1.bf16.msra.mxu0 0
        %431 = vmatprep.subr.bf16.mxu0 0
        %432 = vmatpush1.bf16.msra.mxu0 0
        %433 = vmatprep.subr.bf16.mxu0 0
        %434 = vmatpush1.bf16.msra.mxu0 0
        %435 = vmatprep.subr.bf16.mxu0 0
        %436 = vmatpush1.bf16.msra.mxu0 0
        %437 = vmatprep.subr.bf16.mxu0 0
        %438 = vmatpush1.bf16.msra.mxu0 0
        %439 = vmatprep.subr.bf16.mxu0 0
        %440 = vmatpush1.bf16.msra.mxu0 0
        %441 = vmatprep.subr.bf16.mxu0 0
        %442 = vmatpush1.bf16.msra.mxu0 0
        %443 = vmatprep.mubr.bf16.mxu0 0
        %444 = vmatmul.mubr.bf16.gmra.mrb[0].mxu0 %v409
        %v445 = vpop.f32.mrb[0].mxu0
        %v446 = vadd.f32 0.0, %v445
        %v447 = vpop.f32.mrb[0].mxu0
        %v448 = vpop.f32.mrb[0].mxu0
        %v449 = vadd.f32 0.0, %v448
        %v450 = vpop.f32.mrb[0].mxu0
        %451 = vdwg.mxu0
        %s452 = scalar_lea.vmem %s248, 16 [#allocation3]
        %453 = vst.msk [vmem:[%s452] sm:$0xff] %vm358, %v446
        %454 = vst.msk [vmem:[%s452 + $0x8] sm:$0xff] %vm358, %v449
        %s455 = scalar_lea.vmem %s228, 4 [#allocation2]
        %v456 = vld [vmem:[%s455] sm:$0x3]
        %v458 = vsel %vm265, %v456, 0
        %460 = vmatprep.subr.bf16.mxu0 0
        %461 = vmatpush1.bf16.msra.mxu0 %v458
        %462 = vmatprep.subr.bf16.mxu0 0
        %463 = vmatpush1.bf16.msra.mxu0 0
        %464 = vmatprep.subr.bf16.mxu0 0
        %465 = vmatpush1.bf16.msra.mxu0 0
        %466 = vmatprep.subr.bf16.mxu0 0
        %467 = vmatpush1.bf16.msra.mxu0 0
        %468 = vmatprep.subr.bf16.mxu0 0
        %469 = vmatpush1.bf16.msra.mxu0 0
        %470 = vmatprep.subr.bf16.mxu0 0
        %471 = vmatpush1.bf16.msra.mxu0 0
        %472 = vmatprep.subr.bf16.mxu0 0
        %473 = vmatpush1.bf16.msra.mxu0 0
        %474 = vmatprep.subr.bf16.mxu0 0
        %475 = vmatpush1.bf16.msra.mxu0 0
        %476 = vmatprep.subr.bf16.mxu0 0
        %477 = vmatpush1.bf16.msra.mxu0 0
        %478 = vmatprep.subr.bf16.mxu0 0
        %479 = vmatpush1.bf16.msra.mxu0 0
        %480 = vmatprep.subr.bf16.mxu0 0
        %481 = vmatpush1.bf16.msra.mxu0 0
        %482 = vmatprep.subr.bf16.mxu0 0
        %483 = vmatpush1.bf16.msra.mxu0 0
        %484 = vmatprep.subr.bf16.mxu0 0
        %485 = vmatpush1.bf16.msra.mxu0 0
        %486 = vmatprep.subr.bf16.mxu0 0
        %487 = vmatpush1.bf16.msra.mxu0 0
        %488 = vmatprep.subr.bf16.mxu0 0
        %489 = vmatpush1.bf16.msra.mxu0 0
        %490 = vmatprep.subr.bf16.mxu0 0
        %491 = vmatpush1.bf16.msra.mxu0 0
        %492 = vmatprep.mubr.bf16.mxu0 0
        %493 = vmatmul.mubr.bf16.gmra.mrb[0].mxu0 %v263
        %v494 = vpop.f32.mrb[0].mxu0
        %v495 = vadd.f32 0.0, %v494
        %v496 = vpop.f32.mrb[0].mxu0
        %v497 = vpop.f32.mrb[0].mxu0
        %v498 = vadd.f32 0.0, %v497
        %v499 = vpop.f32.mrb[0].mxu0
        %500 = vdwg.mxu0
        %v501 = vpack.c.bf16 %v498, %v495
        %v503 = vsel %vm261, %v501, 0
        %505 = vmatprep.subr.bf16.mxu0 0
        %506 = vmatpush1.bf16.msra.mxu0 %v315
        %507 = vmatprep.subr.bf16.mxu0 0
        %508 = vmatpush1.bf16.msra.mxu0 0
        %509 = vmatprep.subr.bf16.mxu0 0
        %510 = vmatpush1.bf16.msra.mxu0 0
        %511 = vmatprep.subr.bf16.mxu0 0
        %512 = vmatpush1.bf16.msra.mxu0 0
        %513 = vmatprep.subr.bf16.mxu0 0
        %514 = vmatpush1.bf16.msra.mxu0 0
        %515 = vmatprep.subr.bf16.mxu0 0
        %516 = vmatpush1.bf16.msra.mxu0 0
        %517 = vmatprep.subr.bf16.mxu0 0
        %518 = vmatpush1.bf16.msra.mxu0 0
        %519 = vmatprep.subr.bf16.mxu0 0
        %520 = vmatpush1.bf16.msra.mxu0 0
        %521 = vmatprep.subr.bf16.mxu0 0
        %522 = vmatpush1.bf16.msra.mxu0 0
        %523 = vmatprep.subr.bf16.mxu0 0
        %524 = vmatpush1.bf16.msra.mxu0 0
        %525 = vmatprep.subr.bf16.mxu0 0
        %526 = vmatpush1.bf16.msra.mxu0 0
        %527 = vmatprep.subr.bf16.mxu0 0
        %528 = vmatpush1.bf16.msra.mxu0 0
        %529 = vmatprep.subr.bf16.mxu0 0
        %530 = vmatpush1.bf16.msra.mxu0 0
        %531 = vmatprep.subr.bf16.mxu0 0
        %532 = vmatpush1.bf16.msra.mxu0 0
        %533 = vmatprep.subr.bf16.mxu0 0
        %534 = vmatpush1.bf16.msra.mxu0 0
        %535 = vmatprep.subr.bf16.mxu0 0
        %536 = vmatpush1.bf16.msra.mxu0 0
        %537 = vmatprep.mubr.bf16.mxu0 0
        %538 = vmatmul.mubr.bf16.gmra.mrb[0].mxu0 %v503
        %v539 = vpop.f32.mrb[0].mxu0
        %v540 = vadd.f32 0.0, %v539
        %v541 = vpop.f32.mrb[0].mxu0
        %v542 = vpop.f32.mrb[0].mxu0
        %v543 = vadd.f32 0.0, %v542
        %v544 = vpop.f32.mrb[0].mxu0
        %545 = vdwg.mxu0
        %s546 = scalar_lea.vmem %s248, 32 [#allocation3]
        %547 = vst.msk [vmem:[%s546] sm:$0xff] %vm358, %v540
        %548 = vst.msk [vmem:[%s546 + $0x8] sm:$0xff] %vm358, %v543
        %s549 = scalar_lea.vmem %s228, 6 [#allocation2]
        %v550 = vld [vmem:[%s549] sm:$0x3]
        %v552 = vsel %vm265, %v550, 0
        %554 = vmatprep.subr.bf16.mxu0 0
        %555 = vmatpush1.bf16.msra.mxu0 %v552
        %556 = vmatprep.subr.bf16.mxu0 0
        %557 = vmatpush1.bf16.msra.mxu0 0
        %558 = vmatprep.subr.bf16.mxu0 0
        %559 = vmatpush1.bf16.msra.mxu0 0
        %560 = vmatprep.subr.bf16.mxu0 0
        %561 = vmatpush1.bf16.msra.mxu0 0
        %562 = vmatprep.subr.bf16.mxu0 0
        %563 = vmatpush1.bf16.msra.mxu0 0
        %564 = vmatprep.subr.bf16.mxu0 0
        %565 = vmatpush1.bf16.msra.mxu0 0
        %566 = vmatprep.subr.bf16.mxu0 0
        %567 = vmatpush1.bf16.msra.mxu0 0
        %568 = vmatprep.subr.bf16.mxu0 0
        %569 = vmatpush1.bf16.msra.mxu0 0
        %570 = vmatprep.subr.bf16.mxu0 0
        %571 = vmatpush1.bf16.msra.mxu0 0
        %572 = vmatprep.subr.bf16.mxu0 0
        %573 = vmatpush1.bf16.msra.mxu0 0
        %574 = vmatprep.subr.bf16.mxu0 0
        %575 = vmatpush1.bf16.msra.mxu0 0
        %576 = vmatprep.subr.bf16.mxu0 0
        %577 = vmatpush1.bf16.msra.mxu0 0
        %578 = vmatprep.subr.bf16.mxu0 0
        %579 = vmatpush1.bf16.msra.mxu0 0
        %580 = vmatprep.subr.bf16.mxu0 0
        %581 = vmatpush1.bf16.msra.mxu0 0
        %582 = vmatprep.subr.bf16.mxu0 0
        %583 = vmatpush1.bf16.msra.mxu0 0
        %584 = vmatprep.subr.bf16.mxu0 0
        %585 = vmatpush1.bf16.msra.mxu0 0
        %586 = vmatprep.mubr.bf16.mxu0 0
        %587 = vmatmul.mubr.bf16.gmra.mrb[0].mxu0 %v263
        %v588 = vpop.f32.mrb[0].mxu0
        %v589 = vadd.f32 0.0, %v588
        %v590 = vpop.f32.mrb[0].mxu0
        %v591 = vpop.f32.mrb[0].mxu0
        %v592 = vadd.f32 0.0, %v591
        %v593 = vpop.f32.mrb[0].mxu0
        %594 = vdwg.mxu0
        %v595 = vpack.c.bf16 %v592, %v589
        %v597 = vsel %vm261, %v595, 0
        %599 = vmatprep.subr.bf16.mxu0 0
        %600 = vmatpush1.bf16.msra.mxu0 %v315
        %601 = vmatprep.subr.bf16.mxu0 0
        %602 = vmatpush1.bf16.msra.mxu0 0
        %603 = vmatprep.subr.bf16.mxu0 0
        %604 = vmatpush1.bf16.msra.mxu0 0
        %605 = vmatprep.subr.bf16.mxu0 0
        %606 = vmatpush1.bf16.msra.mxu0 0
        %607 = vmatprep.subr.bf16.mxu0 0
        %608 = vmatpush1.bf16.msra.mxu0 0
        %609 = vmatprep.subr.bf16.mxu0 0
        %610 = vmatpush1.bf16.msra.mxu0 0
        %611 = vmatprep.subr.bf16.mxu0 0
        %612 = vmatpush1.bf16.msra.mxu0 0
        %613 = vmatprep.subr.bf16.mxu0 0
        %614 = vmatpush1.bf16.msra.mxu0 0
        %615 = vmatprep.subr.bf16.mxu0 0
        %616 = vmatpush1.bf16.msra.mxu0 0
        %617 = vmatprep.subr.bf16.mxu0 0
        %618 = vmatpush1.bf16.msra.mxu0 0
        %619 = vmatprep.subr.bf16.mxu0 0
        %620 = vmatpush1.bf16.msra.mxu0 0
        %621 = vmatprep.subr.bf16.mxu0 0
        %622 = vmatpush1.bf16.msra.mxu0 0
        %623 = vmatprep.subr.bf16.mxu0 0
        %624 = vmatpush1.bf16.msra.mxu0 0
        %625 = vmatprep.subr.bf16.mxu0 0
        %626 = vmatpush1.bf16.msra.mxu0 0
        %627 = vmatprep.subr.bf16.mxu0 0
        %628 = vmatpush1.bf16.msra.mxu0 0
        %629 = vmatprep.subr.bf16.mxu0 0
        %630 = vmatpush1.bf16.msra.mxu0 0
        %631 = vmatprep.mubr.bf16.mxu0 0
        %632 = vmatmul.mubr.bf16.gmra.mrb[0].mxu0 %v597
        %v633 = vpop.f32.mrb[0].mxu0
        %v634 = vadd.f32 0.0, %v633
        %v635 = vpop.f32.mrb[0].mxu0
        %v636 = vpop.f32.mrb[0].mxu0
        %v637 = vadd.f32 0.0, %v636
        %v638 = vpop.f32.mrb[0].mxu0
        %639 = vdwg.mxu0
        %s640 = scalar_lea.vmem %s248, 48 [#allocation3]
        %641 = vst.msk [vmem:[%s640] sm:$0xff] %vm358, %v634
        %642 = vst.msk [vmem:[%s640 + $0x8] sm:$0xff] %vm358, %v637
        %s643 = scalar_lea.vmem %s228, 8 [#allocation2]
        %v644 = vld [vmem:[%s643] sm:$0x3]
        %v646 = vsel %vm265, %v644, 0
        %648 = vmatprep.subr.bf16.mxu0 0
        %649 = vmatpush1.bf16.msra.mxu0 %v646
        %650 = vmatprep.subr.bf16.mxu0 0
        %651 = vmatpush1.bf16.msra.mxu0 0
        %652 = vmatprep.subr.bf16.mxu0 0
        %653 = vmatpush1.bf16.msra.mxu0 0
        %654 = vmatprep.subr.bf16.mxu0 0
        %655 = vmatpush1.bf16.msra.mxu0 0
        %656 = vmatprep.subr.bf16.mxu0 0
        %657 = vmatpush1.bf16.msra.mxu0 0
        %658 = vmatprep.subr.bf16.mxu0 0
        %659 = vmatpush1.bf16.msra.mxu0 0
        %660 = vmatprep.subr.bf16.mxu0 0
        %661 = vmatpush1.bf16.msra.mxu0 0
        %662 = vmatprep.subr.bf16.mxu0 0
        %663 = vmatpush1.bf16.msra.mxu0 0
        %664 = vmatprep.subr.bf16.mxu0 0
        %665 = vmatpush1.bf16.msra.mxu0 0
        %666 = vmatprep.subr.bf16.mxu0 0
        %667 = vmatpush1.bf16.msra.mxu0 0
        %668 = vmatprep.subr.bf16.mxu0 0
        %669 = vmatpush1.bf16.msra.mxu0 0
        %670 = vmatprep.subr.bf16.mxu0 0
        %671 = vmatpush1.bf16.msra.mxu0 0
        %672 = vmatprep.subr.bf16.mxu0 0
        %673 = vmatpush1.bf16.msra.mxu0 0
        %674 = vmatprep.subr.bf16.mxu0 0
        %675 = vmatpush1.bf16.msra.mxu0 0
        %676 = vmatprep.subr.bf16.mxu0 0
        %677 = vmatpush1.bf16.msra.mxu0 0
        %678 = vmatprep.subr.bf16.mxu0 0
        %679 = vmatpush1.bf16.msra.mxu0 0
        %680 = vmatprep.mubr.bf16.mxu0 0
        %681 = vmatmul.mubr.bf16.gmra.mrb[0].mxu0 %v263
        %v682 = vpop.f32.mrb[0].mxu0
        %v683 = vadd.f32 0.0, %v682
        %v684 = vpop.f32.mrb[0].mxu0
        %v685 = vpop.f32.mrb[0].mxu0
        %v686 = vadd.f32 0.0, %v685
        %v687 = vpop.f32.mrb[0].mxu0
        %688 = vdwg.mxu0
        %v689 = vpack.c.bf16 %v686, %v683
        %v691 = vsel %vm261, %v689, 0
        %693 = vmatprep.subr.bf16.mxu0 0
        %694 = vmatpush1.bf16.msra.mxu0 %v315
        %695 = vmatprep.subr.bf16.mxu0 0
        %696 = vmatpush1.bf16.msra.mxu0 0
        %697 = vmatprep.subr.bf16.mxu0 0
        %698 = vmatpush1.bf16.msra.mxu0 0
        %699 = vmatprep.subr.bf16.mxu0 0
        %700 = vmatpush1.bf16.msra.mxu0 0
        %701 = vmatprep.subr.bf16.mxu0 0
        %702 = vmatpush1.bf16.msra.mxu0 0
        %703 = vmatprep.subr.bf16.mxu0 0
        %704 = vmatpush1.bf16.msra.mxu0 0
        %705 = vmatprep.subr.bf16.mxu0 0
        %706 = vmatpush1.bf16.msra.mxu0 0
        %707 = vmatprep.subr.bf16.mxu0 0
        %708 = vmatpush1.bf16.msra.mxu0 0
        %709 = vmatprep.subr.bf16.mxu0 0
        %710 = vmatpush1.bf16.msra.mxu0 0
        %711 = vmatprep.subr.bf16.mxu0 0
        %712 = vmatpush1.bf16.msra.mxu0 0
        %713 = vmatprep.subr.bf16.mxu0 0
        %714 = vmatpush1.bf16.msra.mxu0 0
        %715 = vmatprep.subr.bf16.mxu0 0
        %716 = vmatpush1.bf16.msra.mxu0 0
        %717 = vmatprep.subr.bf16.mxu0 0
        %718 = vmatpush1.bf16.msra.mxu0 0
        %719 = vmatprep.subr.bf16.mxu0 0
        %720 = vmatpush1.bf16.msra.mxu0 0
        %721 = vmatprep.subr.bf16.mxu0 0
        %722 = vmatpush1.bf16.msra.mxu0 0
        %723 = vmatprep.subr.bf16.mxu0 0
        %724 = vmatpush1.bf16.msra.mxu0 0
        %725 = vmatprep.mubr.bf16.mxu0 0
        %726 = vmatmul.mubr.bf16.gmra.mrb[0].mxu0 %v691
        %v727 = vpop.f32.mrb[0].mxu0
        %v728 = vadd.f32 0.0, %v727
        %v729 = vpop.f32.mrb[0].mxu0
        %v730 = vpop.f32.mrb[0].mxu0
        %v731 = vadd.f32 0.0, %v730
        %v732 = vpop.f32.mrb[0].mxu0
        %733 = vdwg.mxu0
        %s734 = scalar_lea.vmem %s248, 64 [#allocation3]
        %735 = vst.msk [vmem:[%s734] sm:$0xff] %vm358, %v728
        %736 = vst.msk [vmem:[%s734 + $0x8] sm:$0xff] %vm358, %v731
        %s737 = scalar_lea.vmem %s228, 10 [#allocation2]
        %v738 = vld [vmem:[%s737] sm:$0x3]
        %v740 = vsel %vm265, %v738, 0
        %742 = vmatprep.subr.bf16.mxu0 0
        %743 = vmatpush1.bf16.msra.mxu0 %v740
        %744 = vmatprep.subr.bf16.mxu0 0
        %745 = vmatpush1.bf16.msra.mxu0 0
        %746 = vmatprep.subr.bf16.mxu0 0
        %747 = vmatpush1.bf16.msra.mxu0 0
        %748 = vmatprep.subr.bf16.mxu0 0
        %749 = vmatpush1.bf16.msra.mxu0 0
        %750 = vmatprep.subr.bf16.mxu0 0
        %751 = vmatpush1.bf16.msra.mxu0 0
        %752 = vmatprep.subr.bf16.mxu0 0
        %753 = vmatpush1.bf16.msra.mxu0 0
        %754 = vmatprep.subr.bf16.mxu0 0
        %755 = vmatpush1.bf16.msra.mxu0 0
        %756 = vmatprep.subr.bf16.mxu0 0
        %757 = vmatpush1.bf16.msra.mxu0 0
        %758 = vmatprep.subr.bf16.mxu0 0
        %759 = vmatpush1.bf16.msra.mxu0 0
        %760 = vmatprep.subr.bf16.mxu0 0
        %761 = vmatpush1.bf16.msra.mxu0 0
        %762 = vmatprep.subr.bf16.mxu0 0
        %763 = vmatpush1.bf16.msra.mxu0 0
        %764 = vmatprep.subr.bf16.mxu0 0
        %765 = vmatpush1.bf16.msra.mxu0 0
        %766 = vmatprep.subr.bf16.mxu0 0
        %767 = vmatpush1.bf16.msra.mxu0 0
        %768 = vmatprep.subr.bf16.mxu0 0
        %769 = vmatpush1.bf16.msra.mxu0 0
        %770 = vmatprep.subr.bf16.mxu0 0
        %771 = vmatpush1.bf16.msra.mxu0 0
        %772 = vmatprep.subr.bf16.mxu0 0
        %773 = vmatpush1.bf16.msra.mxu0 0
        %774 = vmatprep.mubr.bf16.mxu0 0
        %775 = vmatmul.mubr.bf16.gmra.mrb[0].mxu0 %v263
        %v776 = vpop.f32.mrb[0].mxu0
        %v777 = vadd.f32 0.0, %v776
        %v778 = vpop.f32.mrb[0].mxu0
        %v779 = vpop.f32.mrb[0].mxu0
        %v780 = vadd.f32 0.0, %v779
        %v781 = vpop.f32.mrb[0].mxu0
        %782 = vdwg.mxu0
        %v783 = vpack.c.bf16 %v780, %v777
        %v785 = vsel %vm261, %v783, 0
        %787 = vmatprep.subr.bf16.mxu0 0
        %788 = vmatpush1.bf16.msra.mxu0 %v315
        %789 = vmatprep.subr.bf16.mxu0 0
        %790 = vmatpush1.bf16.msra.mxu0 0
        %791 = vmatprep.subr.bf16.mxu0 0
        %792 = vmatpush1.bf16.msra.mxu0 0
        %793 = vmatprep.subr.bf16.mxu0 0
        %794 = vmatpush1.bf16.msra.mxu0 0
        %795 = vmatprep.subr.bf16.mxu0 0
        %796 = vmatpush1.bf16.msra.mxu0 0
        %797 = vmatprep.subr.bf16.mxu0 0
        %798 = vmatpush1.bf16.msra.mxu0 0
        %799 = vmatprep.subr.bf16.mxu0 0
        %800 = vmatpush1.bf16.msra.mxu0 0
        %801 = vmatprep.subr.bf16.mxu0 0
        %802 = vmatpush1.bf16.msra.mxu0 0
        %803 = vmatprep.subr.bf16.mxu0 0
        %804 = vmatpush1.bf16.msra.mxu0 0
        %805 = vmatprep.subr.bf16.mxu0 0
        %806 = vmatpush1.bf16.msra.mxu0 0
        %807 = vmatprep.subr.bf16.mxu0 0
        %808 = vmatpush1.bf16.msra.mxu0 0
        %809 = vmatprep.subr.bf16.mxu0 0
        %810 = vmatpush1.bf16.msra.mxu0 0
        %811 = vmatprep.subr.bf16.mxu0 0
        %812 = vmatpush1.bf16.msra.mxu0 0
        %813 = vmatprep.subr.bf16.mxu0 0
        %814 = vmatpush1.bf16.msra.mxu0 0
        %815 = vmatprep.subr.bf16.mxu0 0
        %816 = vmatpush1.bf16.msra.mxu0 0
        %817 = vmatprep.subr.bf16.mxu0 0
        %818 = vmatpush1.bf16.msra.mxu0 0
        %819 = vmatprep.mubr.bf16.mxu0 0
        %820 = vmatmul.mubr.bf16.gmra.mrb[0].mxu0 %v785
        %v821 = vpop.f32.mrb[0].mxu0
        %v822 = vadd.f32 0.0, %v821
        %v823 = vpop.f32.mrb[0].mxu0
        %v824 = vpop.f32.mrb[0].mxu0
        %v825 = vadd.f32 0.0, %v824
        %v826 = vpop.f32.mrb[0].mxu0
        %827 = vdwg.mxu0
        %s828 = scalar_lea.vmem %s248, 80 [#allocation3]
        %829 = vst.msk [vmem:[%s828] sm:$0xff] %vm358, %v822
        %830 = vst.msk [vmem:[%s828 + $0x8] sm:$0xff] %vm358, %v825
        %s831 = sand.u32 %s109, 1
        %s832 = scalar_lea.sflag [#allocation4], %s831
        %s833 = sand.u32 %s109, 1
        %s834 = smul.addr %s833, 96
        %s835 = scalar_lea.vmem [#allocation3], %s834
        // Predicated region
        $region74: #{incremental_segmentation_forward.3} parent=68 // pred_check
          %p836 = pneg %p119
        $region75: #{incremental_segmentation_forward.3} parent=68 // pred_check_branch
          %838 = sbr.rel (%p836) target = $region77
        $region76: #{incremental_segmentation_forward.3} parent=68 // pred_region
          %s839 = smul.u32 6, %s22
          %s841 = ssub.s32 1536, 1536
          %842 = vsyncadd %s832, %s841
          %s843 = smul.addr %s839, 2
          %s844 = smul.addr %s21, 12
          %s845 = sadd.s32 %s843, %s844
          %s846 = smul.addr %s845, 128
          %s847 = scalar_lea.hbm %s3, %s846
          %s848 = sshll.u32 %s835, 4
          %s849 = int_to_ptr.vmem [resolvable:$true] %s848
          %854 = dma.vmem_to_hbm [thread:$0]  %s849, 1536, %s847, %s832, 128, 128, 8
        $region77: #{incremental_segmentation_forward.3} parent=68 // pred_fallthru
          _
      $region69: #{incremental_segmentation_forward.3} parent=5 // pred_fallthru
        _
      %p855 = scmp.le.s32.totalorder 2, %s12
      // Predicated region
      $region78: #{incremental_segmentation_forward.3} parent=5 // pred_check
        %p856 = pneg %p855
      $region79: #{incremental_segmentation_forward.3} parent=5 // pred_check_branch
        %858 = sbr.rel (%p856) target = $region81
      $region80: #{incremental_segmentation_forward.3} parent=5 // pred_region
        %s859 = ssub.s32 %s12, 2
        // Predicated region
        $region82: #{incremental_segmentation_forward.3} parent=80 // pred_check
          %p860 = pneg %p125
        $region83: #{incremental_segmentation_forward.3} parent=80 // pred_check_branch
          %862 = sbr.rel (%p860) target = $region85
        $region84: #{incremental_segmentation_forward.3} parent=80 // pred_region
          %s863 = sand.u32 %s110, 1
          %s864 = scalar_lea.sflag [#allocation4], %s863
          %s865 = sand.u32 %s110, 1
          %s866 = smul.addr %s865, 96
          %s867 = scalar_lea.vmem [#allocation3], %s866
          %868 = dma.done %s864, 1536
        $region85: #{incremental_segmentation_forward.3} parent=80 // pred_fallthru
          _
      $region81: #{incremental_segmentation_forward.3} parent=5 // pred_fallthru
        _
    $region6: #{incremental_segmentation_forward.3} parent=1 // loop_footer
      %s16 = sadd.s32 1, %s12
    $region7: #{incremental_segmentation_forward.3} parent=1 // loop_footer_branch
      %11 = sbr.rel target = $region3
    $region8: #{incremental_segmentation_forward.3} parent=1 // loop_exit
      _
    %869 = vsyncpa [#allocation4], 1
    %s870 = scalar_lea.sflag [#allocation4], 1
    %871 = vsyncpa %s870, 1

// kernel: incremental_segmentation_forward.2
$region0: #{incremental_segmentation_forward.2}
  #allocation0 [shape = 'u32[]', space=smem, size = 0x4, offset = 0x4, fixed_abs, tag = 'smem constant byte address 0x4 - core index']
  #allocation1 [shape = 'u32[144,128]{1,0:T(1,128)}', space=vmem, size = 0x12000, scoped, tag = 'internal scratch']
  %s0 = inlined_call_operand.vmem [shape: bf16[16,32,4], index: 0, kind: input, shape index: {}]
  %s1 = inlined_call_operand.vmem [shape: bf16[4,32], index: 1, kind: input, shape index: {}]
  %s2 = inlined_call_operand.vmem [shape: f32[1,32], index: 2, kind: input, shape index: {}]
  %s3 = inlined_call_operand.vmem [shape: bf16[32,32], index: 3, kind: input, shape index: {}]
  %s4 = inlined_call_operand.vmem [shape: f32[1,32], index: 4, kind: input, shape index: {}]
  %s5 = inlined_call_operand.vmem [shape: bf16[6,32], index: 5, kind: input, shape index: {}]
  %s6 = inlined_call_operand.vmem [shape: f32[6,1], index: 6, kind: input, shape index: {}]
  %s7 = inlined_call_operand.vmem [shape: bf16[6,32], index: 7, kind: output, shape index: {}]
  %s8 = sld [smem:[#allocation0]]
  $region38: #{incremental_segmentation_forward.2} parent=0
    _
  %s10 = ssub.s32 1, %s8
  %s11 = scalar_select 0, %s10, %s8
  // Predicated region
  $region2: #{incremental_segmentation_forward.2} parent=0 // pred_check
    _
  $region3: #{incremental_segmentation_forward.2} parent=0 // pred_check_branch
    %13 = sbr.rel (0) target = $region5
  $region4: #{incremental_segmentation_forward.2} parent=0 // pred_region
    _
  $region5: #{incremental_segmentation_forward.2} parent=0 // pred_fallthru
    _
  // Predicated region
  $region6: #{incremental_segmentation_forward.2} parent=0 // pred_check
    _
  $region7: #{incremental_segmentation_forward.2} parent=0 // pred_check_branch
    %15 = sbr.rel (0) target = $region9
  $region8: #{incremental_segmentation_forward.2} parent=0 // pred_region
    _
  $region9: #{incremental_segmentation_forward.2} parent=0 // pred_fallthru
    _
  // Predicated region
  $region10: #{incremental_segmentation_forward.2} parent=0 // pred_check
    _
  $region11: #{incremental_segmentation_forward.2} parent=0 // pred_check_branch
    %17 = sbr.rel (0) target = $region13
  $region12: #{incremental_segmentation_forward.2} parent=0 // pred_region
    _
  $region13: #{incremental_segmentation_forward.2} parent=0 // pred_fallthru
    _
  // Predicated region
  $region14: #{incremental_segmentation_forward.2} parent=0 // pred_check
    _
  $region15: #{incremental_segmentation_forward.2} parent=0 // pred_check_branch
    %19 = sbr.rel (0) target = $region17
  $region16: #{incremental_segmentation_forward.2} parent=0 // pred_region
    _
  $region17: #{incremental_segmentation_forward.2} parent=0 // pred_fallthru
    _
  // Predicated region
  $region18: #{incremental_segmentation_forward.2} parent=0 // pred_check
    _
  $region19: #{incremental_segmentation_forward.2} parent=0 // pred_check_branch
    %21 = sbr.rel (0) target = $region21
  $region20: #{incremental_segmentation_forward.2} parent=0 // pred_region
    _
  $region21: #{incremental_segmentation_forward.2} parent=0 // pred_fallthru
    _
  // Predicated region
  $region22: #{incremental_segmentation_forward.2} parent=0 // pred_check
    _
  $region23: #{incremental_segmentation_forward.2} parent=0 // pred_check_branch
    %23 = sbr.rel (0) target = $region25
  $region24: #{incremental_segmentation_forward.2} parent=0 // pred_region
    _
  $region25: #{incremental_segmentation_forward.2} parent=0 // pred_fallthru
    _
  // Predicated region
  $region26: #{incremental_segmentation_forward.2} parent=0 // pred_check
    _
  $region27: #{incremental_segmentation_forward.2} parent=0 // pred_check_branch
    %25 = sbr.rel (0) target = $region29
  $region28: #{incremental_segmentation_forward.2} parent=0 // pred_region
    _
  $region29: #{incremental_segmentation_forward.2} parent=0 // pred_fallthru
    _
  %v27 = vld [vmem:[%s1] sm:$0x3]
  %v28 = vld [vmem:[%s2] sm:$0x1]
  %v29 = vld [vmem:[%s0] sm:$0xf]
  %v30 = vld [vmem:[%s0 + $0x4] sm:$0xf]
  %v31 = vld [vmem:[%s0 + $0x8] sm:$0xf]
  %v32 = vld [vmem:[%s0 + $0xc] sm:$0xf]
  %v34 = vlaneseq
  %v35 = vshrl.u32 %v34, 7
  %v36 = vsub.s32 0, %v35
  %v37 = vrot.slane %v28, %v36
  %v43 = vunpack.c.l.b16 %v29
  %v44 = vunpack.c.l.b16 %v30
  %v45 = vunpack.c.l.b16 %v31
  %v46 = vunpack.c.l.b16 %v32
  %v47 = vpack.c.b16 %v44, %v43
  %v48 = vpack.c.b16 %v46, %v45
  %vm49 = vcmask 31744
  %v51 = vsel %vm49, %v47, 0
  %v54 = vsel %vm49, %v48, 0
  %vm56 = vcmask 1041408
  %v58 = vsel %vm56, %v27, 0
  %60 = vmatprep.subr.bf16.mxu0 0
  %61 = vmatpush1.bf16.msra.mxu0 %v58
  %62 = vmatprep.subr.bf16.mxu0 0
  %63 = vmatpush1.bf16.msra.mxu0 0
  %64 = vmatprep.subr.bf16.mxu0 0
  %65 = vmatpush1.bf16.msra.mxu0 0
  %66 = vmatprep.subr.bf16.mxu0 0
  %67 = vmatpush1.bf16.msra.mxu0 0
  %68 = vmatprep.subr.bf16.mxu0 0
  %69 = vmatpush1.bf16.msra.mxu0 0
  %70 = vmatprep.subr.bf16.mxu0 0
  %71 = vmatpush1.bf16.msra.mxu0 0
  %72 = vmatprep.subr.bf16.mxu0 0
  %73 = vmatpush1.bf16.msra.mxu0 0
  %74 = vmatprep.subr.bf16.mxu0 0
  %75 = vmatpush1.bf16.msra.mxu0 0
  %76 = vmatprep.subr.bf16.mxu0 0
  %77 = vmatpush1.bf16.msra.mxu0 0
  %78 = vmatprep.subr.bf16.mxu0 0
  %79 = vmatpush1.bf16.msra.mxu0 0
  %80 = vmatprep.subr.bf16.mxu0 0
  %81 = vmatpush1.bf16.msra.mxu0 0
  %82 = vmatprep.subr.bf16.mxu0 0
  %83 = vmatpush1.bf16.msra.mxu0 0
  %84 = vmatprep.subr.bf16.mxu0 0
  %85 = vmatpush1.bf16.msra.mxu0 0
  %86 = vmatprep.subr.bf16.mxu0 0
  %87 = vmatpush1.bf16.msra.mxu0 0
  %88 = vmatprep.subr.bf16.mxu0 0
  %89 = vmatpush1.bf16.msra.mxu0 0
  %90 = vmatprep.subr.bf16.mxu0 0
  %91 = vmatpush1.bf16.msra.mxu0 0
  %92 = vmatprep.mubr.bf16.mxu0 0
  %93 = vmatmul.mubr.bf16.gmra.mrb[0].mxu0 %v51
  %v94 = vpop.f32.mrb[0].mxu0
  %v95 = vadd.f32 %v37, %v94
  %v96 = vpop.f32.mrb[0].mxu0
  %v97 = vpop.f32.mrb[0].mxu0
  %v98 = vadd.f32 %v37, %v97
  %v99 = vpop.f32.mrb[0].mxu0
  %100 = vmatprep.mubr.bf16.mxu0 0
  %101 = vmatmul.mubr.bf16.gmra.mrb[0].mxu0 %v54
  %v102 = vpop.f32.mrb[0].mxu0
  %v103 = vadd.f32 %v37, %v102
  %v104 = vpop.f32.mrb[0].mxu0
  %v105 = vpop.f32.mrb[0].mxu0
  %v106 = vadd.f32 %v37, %v105
  %v107 = vpop.f32.mrb[0].mxu0
  %108 = vdwg.mxu0
  %v109 = vmax.f32 %v95, 0.0
  %v110 = vmax.f32 %v98, 0.0
  %v111 = vmax.f32 %v103, 0.0
  %v112 = vmax.f32 %v106, 0.0
  %s113 = scalar_lea.vmem %s0, 16
  %v114 = vld [vmem:[%s113] sm:$0xf]
  %v115 = vld [vmem:[%s113 + $0x4] sm:$0xf]
  %v116 = vld [vmem:[%s113 + $0x8] sm:$0xf]
  %v117 = vld [vmem:[%s113 + $0xc] sm:$0xf]
  %v122 = vunpack.c.l.b16 %v114
  %v123 = vunpack.c.l.b16 %v115
  %v124 = vunpack.c.l.b16 %v116
  %v125 = vunpack.c.l.b16 %v117
  %v126 = vpack.c.b16 %v123, %v122
  %v127 = vpack.c.b16 %v125, %v124
  %v129 = vsel %vm49, %v126, 0
  %v132 = vsel %vm49, %v127, 0
  %134 = vmatprep.subr.bf16.mxu0 0
  %135 = vmatpush1.bf16.msra.mxu0 %v58
  %136 = vmatprep.subr.bf16.mxu0 0
  %137 = vmatpush1.bf16.msra.mxu0 0
  %138 = vmatprep.subr.bf16.mxu0 0
  %139 = vmatpush1.bf16.msra.mxu0 0
  %140 = vmatprep.subr.bf16.mxu0 0
  %141 = vmatpush1.bf16.msra.mxu0 0
  %142 = vmatprep.subr.bf16.mxu0 0
  %143 = vmatpush1.bf16.msra.mxu0 0
  %144 = vmatprep.subr.bf16.mxu0 0
  %145 = vmatpush1.bf16.msra.mxu0 0
  %146 = vmatprep.subr.bf16.mxu0 0
  %147 = vmatpush1.bf16.msra.mxu0 0
  %148 = vmatprep.subr.bf16.mxu0 0
  %149 = vmatpush1.bf16.msra.mxu0 0
  %150 = vmatprep.subr.bf16.mxu0 0
  %151 = vmatpush1.bf16.msra.mxu0 0
  %152 = vmatprep.subr.bf16.mxu0 0
  %153 = vmatpush1.bf16.msra.mxu0 0
  %154 = vmatprep.subr.bf16.mxu0 0
  %155 = vmatpush1.bf16.msra.mxu0 0
  %156 = vmatprep.subr.bf16.mxu0 0
  %157 = vmatpush1.bf16.msra.mxu0 0
  %158 = vmatprep.subr.bf16.mxu0 0
  %159 = vmatpush1.bf16.msra.mxu0 0
  %160 = vmatprep.subr.bf16.mxu0 0
  %161 = vmatpush1.bf16.msra.mxu0 0
  %162 = vmatprep.subr.bf16.mxu0 0
  %163 = vmatpush1.bf16.msra.mxu0 0
  %164 = vmatprep.subr.bf16.mxu0 0
  %165 = vmatpush1.bf16.msra.mxu0 0
  %166 = vmatprep.mubr.bf16.mxu0 0
  %167 = vmatmul.mubr.bf16.gmra.mrb[0].mxu0 %v129
  %v168 = vpop.f32.mrb[0].mxu0
  %v169 = vadd.f32 %v37, %v168
  %v170 = vpop.f32.mrb[0].mxu0
  %v171 = vpop.f32.mrb[0].mxu0
  %v172 = vadd.f32 %v37, %v171
  %v173 = vpop.f32.mrb[0].mxu0
  %174 = vmatprep.mubr.bf16.mxu0 0
  %175 = vmatmul.mubr.bf16.gmra.mrb[0].mxu0 %v132
  %v176 = vpop.f32.mrb[0].mxu0
  %v177 = vadd.f32 %v37, %v176
  %v178 = vpop.f32.mrb[0].mxu0
  %v179 = vpop.f32.mrb[0].mxu0
  %v180 = vadd.f32 %v37, %v179
  %v181 = vpop.f32.mrb[0].mxu0
  %182 = vdwg.mxu0
  %v183 = vmax.f32 %v169, 0.0
  %v184 = vmax.f32 %v172, 0.0
  %v185 = vmax.f32 %v177, 0.0
  %v186 = vmax.f32 %v180, 0.0
  %v187 = vadd.f32 %v109, %v183
  %v188 = vadd.f32 %v110, %v184
  %v189 = vadd.f32 %v111, %v185
  %v190 = vadd.f32 %v112, %v186
  %s191 = scalar_lea.vmem %s0, 32
  %v192 = vld [vmem:[%s191] sm:$0xf]
  %v193 = vld [vmem:[%s191 + $0x4] sm:$0xf]
  %v194 = vld [vmem:[%s191 + $0x8] sm:$0xf]
  %v195 = vld [vmem:[%s191 + $0xc] sm:$0xf]
  %v200 = vunpack.c.l.b16 %v192
  %v201 = vunpack.c.l.b16 %v193
  %v202 = vunpack.c.l.b16 %v194
  %v203 = vunpack.c.l.b16 %v195
  %v204 = vpack.c.b16 %v201, %v200
  %v205 = vpack.c.b16 %v203, %v202
  %v207 = vsel %vm49, %v204, 0
  %v210 = vsel %vm49, %v205, 0
  %212 = vmatprep.subr.bf16.mxu0 0
  %213 = vmatpush1.bf16.msra.mxu0 %v58
  %214 = vmatprep.subr.bf16.mxu0 0
  %215 = vmatpush1.bf16.msra.mxu0 0
  %216 = vmatprep.subr.bf16.mxu0 0
  %217 = vmatpush1.bf16.msra.mxu0 0
  %218 = vmatprep.subr.bf16.mxu0 0
  %219 = vmatpush1.bf16.msra.mxu0 0
  %220 = vmatprep.subr.bf16.mxu0 0
  %221 = vmatpush1.bf16.msra.mxu0 0
  %222 = vmatprep.subr.bf16.mxu0 0
  %223 = vmatpush1.bf16.msra.mxu0 0
  %224 = vmatprep.subr.bf16.mxu0 0
  %225 = vmatpush1.bf16.msra.mxu0 0
  %226 = vmatprep.subr.bf16.mxu0 0
  %227 = vmatpush1.bf16.msra.mxu0 0
  %228 = vmatprep.subr.bf16.mxu0 0
  %229 = vmatpush1.bf16.msra.mxu0 0
  %230 = vmatprep.subr.bf16.mxu0 0
  %231 = vmatpush1.bf16.msra.mxu0 0
  %232 = vmatprep.subr.bf16.mxu0 0
  %233 = vmatpush1.bf16.msra.mxu0 0
  %234 = vmatprep.subr.bf16.mxu0 0
  %235 = vmatpush1.bf16.msra.mxu0 0
  %236 = vmatprep.subr.bf16.mxu0 0
  %237 = vmatpush1.bf16.msra.mxu0 0
  %238 = vmatprep.subr.bf16.mxu0 0
  %239 = vmatpush1.bf16.msra.mxu0 0
  %240 = vmatprep.subr.bf16.mxu0 0
  %241 = vmatpush1.bf16.msra.mxu0 0
  %242 = vmatprep.subr.bf16.mxu0 0
  %243 = vmatpush1.bf16.msra.mxu0 0
  %244 = vmatprep.mubr.bf16.mxu0 0
  %245 = vmatmul.mubr.bf16.gmra.mrb[0].mxu0 %v207
  %v246 = vpop.f32.mrb[0].mxu0
  %v247 = vadd.f32 %v37, %v246
  %v248 = vpop.f32.mrb[0].mxu0
  %v249 = vpop.f32.mrb[0].mxu0
  %v250 = vadd.f32 %v37, %v249
  %v251 = vpop.f32.mrb[0].mxu0
  %252 = vmatprep.mubr.bf16.mxu0 0
  %253 = vmatmul.mubr.bf16.gmra.mrb[0].mxu0 %v210
  %v254 = vpop.f32.mrb[0].mxu0
  %v255 = vadd.f32 %v37, %v254
  %v256 = vpop.f32.mrb[0].mxu0
  %v257 = vpop.f32.mrb[0].mxu0
  %v258 = vadd.f32 %v37, %v257
  %v259 = vpop.f32.mrb[0].mxu0
  %260 = vdwg.mxu0
  %v261 = vmax.f32 %v247, 0.0
  %v262 = vmax.f32 %v250, 0.0
  %v263 = vmax.f32 %v255, 0.0
  %v264 = vmax.f32 %v258, 0.0
  %v265 = vadd.f32 %v187, %v261
  %v266 = vadd.f32 %v188, %v262
  %v267 = vadd.f32 %v189, %v263
  %v268 = vadd.f32 %v190, %v264
  %s269 = scalar_lea.vmem %s0, 48
  %v270 = vld [vmem:[%s269] sm:$0xf]
  %v271 = vld [vmem:[%s269 + $0x4] sm:$0xf]
  %v272 = vld [vmem:[%s269 + $0x8] sm:$0xf]
  %v273 = vld [vmem:[%s269 + $0xc] sm:$0xf]
  %v278 = vunpack.c.l.b16 %v270
  %v279 = vunpack.c.l.b16 %v271
  %v280 = vunpack.c.l.b16 %v272
  %v281 = vunpack.c.l.b16 %v273
  %v282 = vpack.c.b16 %v279, %v278
  %v283 = vpack.c.b16 %v281, %v280
  %v285 = vsel %vm49, %v282, 0
  %v288 = vsel %vm49, %v283, 0
  %290 = vmatprep.subr.bf16.mxu0 0
  %291 = vmatpush1.bf16.msra.mxu0 %v58
  %292 = vmatprep.subr.bf16.mxu0 0
  %293 = vmatpush1.bf16.msra.mxu0 0
  %294 = vmatprep.subr.bf16.mxu0 0
  %295 = vmatpush1.bf16.msra.mxu0 0
  %296 = vmatprep.subr.bf16.mxu0 0
  %297 = vmatpush1.bf16.msra.mxu0 0
  %298 = vmatprep.subr.bf16.mxu0 0
  %299 = vmatpush1.bf16.msra.mxu0 0
  %300 = vmatprep.subr.bf16.mxu0 0
  %301 = vmatpush1.bf16.msra.mxu0 0
  %302 = vmatprep.subr.bf16.mxu0 0
  %303 = vmatpush1.bf16.msra.mxu0 0
  %304 = vmatprep.subr.bf16.mxu0 0
  %305 = vmatpush1.bf16.msra.mxu0 0
  %306 = vmatprep.subr.bf16.mxu0 0
  %307 = vmatpush1.bf16.msra.mxu0 0
  %308 = vmatprep.subr.bf16.mxu0 0
  %309 = vmatpush1.bf16.msra.mxu0 0
  %310 = vmatprep.subr.bf16.mxu0 0
  %311 = vmatpush1.bf16.msra.mxu0 0
  %312 = vmatprep.subr.bf16.mxu0 0
  %313 = vmatpush1.bf16.msra.mxu0 0
  %314 = vmatprep.subr.bf16.mxu0 0
  %315 = vmatpush1.bf16.msra.mxu0 0
  %316 = vmatprep.subr.bf16.mxu0 0
  %317 = vmatpush1.bf16.msra.mxu0 0
  %318 = vmatprep.subr.bf16.mxu0 0
  %319 = vmatpush1.bf16.msra.mxu0 0
  %320 = vmatprep.subr.bf16.mxu0 0
  %321 = vmatpush1.bf16.msra.mxu0 0
  %322 = vmatprep.mubr.bf16.mxu0 0
  %323 = vmatmul.mubr.bf16.gmra.mrb[0].mxu0 %v285
  %v324 = vpop.f32.mrb[0].mxu0
  %v325 = vadd.f32 %v37, %v324
  %v326 = vpop.f32.mrb[0].mxu0
  %v327 = vpop.f32.mrb[0].mxu0
  %v328 = vadd.f32 %v37, %v327
  %v329 = vpop.f32.mrb[0].mxu0
  %330 = vmatprep.mubr.bf16.mxu0 0
  %331 = vmatmul.mubr.bf16.gmra.mrb[0].mxu0 %v288
  %v332 = vpop.f32.mrb[0].mxu0
  %v333 = vadd.f32 %v37, %v332
  %v334 = vpop.f32.mrb[0].mxu0
  %v335 = vpop.f32.mrb[0].mxu0
  %v336 = vadd.f32 %v37, %v335
  %v337 = vpop.f32.mrb[0].mxu0
  %338 = vdwg.mxu0
  %v339 = vmax.f32 %v325, 0.0
  %v340 = vmax.f32 %v328, 0.0
  %v341 = vmax.f32 %v333, 0.0
  %v342 = vmax.f32 %v336, 0.0
  %v343 = vadd.f32 %v265, %v339
  %v344 = vadd.f32 %v266, %v340
  %v345 = vadd.f32 %v267, %v341
  %v346 = vadd.f32 %v268, %v342
  %s347 = scalar_lea.vmem %s0, 64
  %v348 = vld [vmem:[%s347] sm:$0xf]
  %v349 = vld [vmem:[%s347 + $0x4] sm:$0xf]
  %v350 = vld [vmem:[%s347 + $0x8] sm:$0xf]
  %v351 = vld [vmem:[%s347 + $0xc] sm:$0xf]
  %v356 = vunpack.c.l.b16 %v348
  %v357 = vunpack.c.l.b16 %v349
  %v358 = vunpack.c.l.b16 %v350
  %v359 = vunpack.c.l.b16 %v351
  %v360 = vpack.c.b16 %v357, %v356
  %v361 = vpack.c.b16 %v359, %v358
  %v363 = vsel %vm49, %v360, 0
  %v366 = vsel %vm49, %v361, 0
  %368 = vmatprep.subr.bf16.mxu0 0
  %369 = vmatpush1.bf16.msra.mxu0 %v58
  %370 = vmatprep.subr.bf16.mxu0 0
  %371 = vmatpush1.bf16.msra.mxu0 0
  %372 = vmatprep.subr.bf16.mxu0 0
  %373 = vmatpush1.bf16.msra.mxu0 0
  %374 = vmatprep.subr.bf16.mxu0 0
  %375 = vmatpush1.bf16.msra.mxu0 0
  %376 = vmatprep.subr.bf16.mxu0 0
  %377 = vmatpush1.bf16.msra.mxu0 0
  %378 = vmatprep.subr.bf16.mxu0 0
  %379 = vmatpush1.bf16.msra.mxu0 0
  %380 = vmatprep.subr.bf16.mxu0 0
  %381 = vmatpush1.bf16.msra.mxu0 0
  %382 = vmatprep.subr.bf16.mxu0 0
  %383 = vmatpush1.bf16.msra.mxu0 0
  %384 = vmatprep.subr.bf16.mxu0 0
  %385 = vmatpush1.bf16.msra.mxu0 0
  %386 = vmatprep.subr.bf16.mxu0 0
  %387 = vmatpush1.bf16.msra.mxu0 0
  %388 = vmatprep.subr.bf16.mxu0 0
  %389 = vmatpush1.bf16.msra.mxu0 0
  %390 = vmatprep.subr.bf16.mxu0 0
  %391 = vmatpush1.bf16.msra.mxu0 0
  %392 = vmatprep.subr.bf16.mxu0 0
  %393 = vmatpush1.bf16.msra.mxu0 0
  %394 = vmatprep.subr.bf16.mxu0 0
  %395 = vmatpush1.bf16.msra.mxu0 0
  %396 = vmatprep.subr.bf16.mxu0 0
  %397 = vmatpush1.bf16.msra.mxu0 0
  %398 = vmatprep.subr.bf16.mxu0 0
  %399 = vmatpush1.bf16.msra.mxu0 0
  %400 = vmatprep.mubr.bf16.mxu0 0
  %401 = vmatmul.mubr.bf16.gmra.mrb[0].mxu0 %v363
  %v402 = vpop.f32.mrb[0].mxu0
  %v403 = vadd.f32 %v37, %v402
  %v404 = vpop.f32.mrb[0].mxu0
  %v405 = vpop.f32.mrb[0].mxu0
  %v406 = vadd.f32 %v37, %v405
  %v407 = vpop.f32.mrb[0].mxu0
  %408 = vmatprep.mubr.bf16.mxu0 0
  %409 = vmatmul.mubr.bf16.gmra.mrb[0].mxu0 %v366
  %v410 = vpop.f32.mrb[0].mxu0
  %v411 = vadd.f32 %v37, %v410
  %v412 = vpop.f32.mrb[0].mxu0
  %v413 = vpop.f32.mrb[0].mxu0
  %v414 = vadd.f32 %v37, %v413
  %v415 = vpop.f32.mrb[0].mxu0
  %416 = vdwg.mxu0
  %v417 = vmax.f32 %v403, 0.0
  %v418 = vmax.f32 %v406, 0.0
  %v419 = vmax.f32 %v411, 0.0
  %v420 = vmax.f32 %v414, 0.0
  %v421 = vadd.f32 %v343, %v417
  %v422 = vadd.f32 %v344, %v418
  %v423 = vadd.f32 %v345, %v419
  %v424 = vadd.f32 %v346, %v420
  %s425 = scalar_lea.vmem %s0, 80
  %v426 = vld [vmem:[%s425] sm:$0xf]
  %v427 = vld [vmem:[%s425 + $0x4] sm:$0xf]
  %v428 = vld [vmem:[%s425 + $0x8] sm:$0xf]
  %v429 = vld [vmem:[%s425 + $0xc] sm:$0xf]
  %v434 = vunpack.c.l.b16 %v426
  %v435 = vunpack.c.l.b16 %v427
  %v436 = vunpack.c.l.b16 %v428
  %v437 = vunpack.c.l.b16 %v429
  %v438 = vpack.c.b16 %v435, %v434
  %v439 = vpack.c.b16 %v437, %v436
  %v441 = vsel %vm49, %v438, 0
  %v444 = vsel %vm49, %v439, 0
  %446 = vmatprep.subr.bf16.mxu0 0
  %447 = vmatpush1.bf16.msra.mxu0 %v58
  %448 = vmatprep.subr.bf16.mxu0 0
  %449 = vmatpush1.bf16.msra.mxu0 0
  %450 = vmatprep.subr.bf16.mxu0 0
  %451 = vmatpush1.bf16.msra.mxu0 0
  %452 = vmatprep.subr.bf16.mxu0 0
  %453 = vmatpush1.bf16.msra.mxu0 0
  %454 = vmatprep.subr.bf16.mxu0 0
  %455 = vmatpush1.bf16.msra.mxu0 0
  %456 = vmatprep.subr.bf16.mxu0 0
  %457 = vmatpush1.bf16.msra.mxu0 0
  %458 = vmatprep.subr.bf16.mxu0 0
  %459 = vmatpush1.bf16.msra.mxu0 0
  %460 = vmatprep.subr.bf16.mxu0 0
  %461 = vmatpush1.bf16.msra.mxu0 0
  %462 = vmatprep.subr.bf16.mxu0 0
  %463 = vmatpush1.bf16.msra.mxu0 0
  %464 = vmatprep.subr.bf16.mxu0 0
  %465 = vmatpush1.bf16.msra.mxu0 0
  %466 = vmatprep.subr.bf16.mxu0 0
  %467 = vmatpush1.bf16.msra.mxu0 0
  %468 = vmatprep.subr.bf16.mxu0 0
  %469 = vmatpush1.bf16.msra.mxu0 0
  %470 = vmatprep.subr.bf16.mxu0 0
  %471 = vmatpush1.bf16.msra.mxu0 0
  %472 = vmatprep.subr.bf16.mxu0 0
  %473 = vmatpush1.bf16.msra.mxu0 0
  %474 = vmatprep.subr.bf16.mxu0 0
  %475 = vmatpush1.bf16.msra.mxu0 0
  %476 = vmatprep.subr.bf16.mxu0 0
  %477 = vmatpush1.bf16.msra.mxu0 0
  %478 = vmatprep.mubr.bf16.mxu0 0
  %479 = vmatmul.mubr.bf16.gmra.mrb[0].mxu0 %v441
  %v480 = vpop.f32.mrb[0].mxu0
  %v481 = vadd.f32 %v37, %v480
  %v482 = vpop.f32.mrb[0].mxu0
  %v483 = vpop.f32.mrb[0].mxu0
  %v484 = vadd.f32 %v37, %v483
  %v485 = vpop.f32.mrb[0].mxu0
  %486 = vmatprep.mubr.bf16.mxu0 0
  %487 = vmatmul.mubr.bf16.gmra.mrb[0].mxu0 %v444
  %v488 = vpop.f32.mrb[0].mxu0
  %v489 = vadd.f32 %v37, %v488
  %v490 = vpop.f32.mrb[0].mxu0
  %v491 = vpop.f32.mrb[0].mxu0
  %v492 = vadd.f32 %v37, %v491
  %v493 = vpop.f32.mrb[0].mxu0
  %494 = vdwg.mxu0
  %v495 = vmax.f32 %v481, 0.0
  %v496 = vmax.f32 %v484, 0.0
  %v497 = vmax.f32 %v489, 0.0
  %v498 = vmax.f32 %v492, 0.0
  %v499 = vadd.f32 %v421, %v495
  %v500 = vadd.f32 %v422, %v496
  %v501 = vadd.f32 %v423, %v497
  %v502 = vadd.f32 %v424, %v498
  %s503 = scalar_lea.vmem %s0, 96
  %v504 = vld [vmem:[%s503] sm:$0xf]
  %v505 = vld [vmem:[%s503 + $0x4] sm:$0xf]
  %v506 = vld [vmem:[%s503 + $0x8] sm:$0xf]
  %v507 = vld [vmem:[%s503 + $0xc] sm:$0xf]
  %v512 = vunpack.c.l.b16 %v504
  %v513 = vunpack.c.l.b16 %v505
  %v514 = vunpack.c.l.b16 %v506
  %v515 = vunpack.c.l.b16 %v507
  %v516 = vpack.c.b16 %v513, %v512
  %v517 = vpack.c.b16 %v515, %v514
  %v519 = vsel %vm49, %v516, 0
  %v522 = vsel %vm49, %v517, 0
  %524 = vmatprep.subr.bf16.mxu0 0
  %525 = vmatpush1.bf16.msra.mxu0 %v58
  %526 = vmatprep.subr.bf16.mxu0 0
  %527 = vmatpush1.bf16.msra.mxu0 0
  %528 = vmatprep.subr.bf16.mxu0 0
  %529 = vmatpush1.bf16.msra.mxu0 0
  %530 = vmatprep.subr.bf16.mxu0 0
  %531 = vmatpush1.bf16.msra.mxu0 0
  %532 = vmatprep.subr.bf16.mxu0 0
  %533 = vmatpush1.bf16.msra.mxu0 0
  %534 = vmatprep.subr.bf16.mxu0 0
  %535 = vmatpush1.bf16.msra.mxu0 0
  %536 = vmatprep.subr.bf16.mxu0 0
  %537 = vmatpush1.bf16.msra.mxu0 0
  %538 = vmatprep.subr.bf16.mxu0 0
  %539 = vmatpush1.bf16.msra.mxu0 0
  %540 = vmatprep.subr.bf16.mxu0 0
  %541 = vmatpush1.bf16.msra.mxu0 0
  %542 = vmatprep.subr.bf16.mxu0 0
  %543 = vmatpush1.bf16.msra.mxu0 0
  %544 = vmatprep.subr.bf16.mxu0 0
  %545 = vmatpush1.bf16.msra.mxu0 0
  %546 = vmatprep.subr.bf16.mxu0 0
  %547 = vmatpush1.bf16.msra.mxu0 0
  %548 = vmatprep.subr.bf16.mxu0 0
  %549 = vmatpush1.bf16.msra.mxu0 0
  %550 = vmatprep.subr.bf16.mxu0 0
  %551 = vmatpush1.bf16.msra.mxu0 0
  %552 = vmatprep.subr.bf16.mxu0 0
  %553 = vmatpush1.bf16.msra.mxu0 0
  %554 = vmatprep.subr.bf16.mxu0 0
  %555 = vmatpush1.bf16.msra.mxu0 0
  %556 = vmatprep.mubr.bf16.mxu0 0
  %557 = vmatmul.mubr.bf16.gmra.mrb[0].mxu0 %v519
  %v558 = vpop.f32.mrb[0].mxu0
  %v559 = vadd.f32 %v37, %v558
  %v560 = vpop.f32.mrb[0].mxu0
  %v561 = vpop.f32.mrb[0].mxu0
  %v562 = vadd.f32 %v37, %v561
  %v563 = vpop.f32.mrb[0].mxu0
  %564 = vmatprep.mubr.bf16.mxu0 0
  %565 = vmatmul.mubr.bf16.gmra.mrb[0].mxu0 %v522
  %v566 = vpop.f32.mrb[0].mxu0
  %v567 = vadd.f32 %v37, %v566
  %v568 = vpop.f32.mrb[0].mxu0
  %v569 = vpop.f32.mrb[0].mxu0
  %v570 = vadd.f32 %v37, %v569
  %v571 = vpop.f32.mrb[0].mxu0
  %572 = vdwg.mxu0
  %v573 = vmax.f32 %v559, 0.0
  %v574 = vmax.f32 %v562, 0.0
  %v575 = vmax.f32 %v567, 0.0
  %v576 = vmax.f32 %v570, 0.0
  %v577 = vadd.f32 %v499, %v573
  %v578 = vadd.f32 %v500, %v574
  %v579 = vadd.f32 %v501, %v575
  %v580 = vadd.f32 %v502, %v576
  %s581 = scalar_lea.vmem %s0, 112
  %v582 = vld [vmem:[%s581] sm:$0xf]
  %v583 = vld [vmem:[%s581 + $0x4] sm:$0xf]
  %v584 = vld [vmem:[%s581 + $0x8] sm:$0xf]
  %v585 = vld [vmem:[%s581 + $0xc] sm:$0xf]
  %v590 = vunpack.c.l.b16 %v582
  %v591 = vunpack.c.l.b16 %v583
  %v592 = vunpack.c.l.b16 %v584
  %v593 = vunpack.c.l.b16 %v585
  %v594 = vpack.c.b16 %v591, %v590
  %v595 = vpack.c.b16 %v593, %v592
  %v597 = vsel %vm49, %v594, 0
  %v600 = vsel %vm49, %v595, 0
  %602 = vmatprep.subr.bf16.mxu0 0
  %603 = vmatpush1.bf16.msra.mxu0 %v58
  %604 = vmatprep.subr.bf16.mxu0 0
  %605 = vmatpush1.bf16.msra.mxu0 0
  %606 = vmatprep.subr.bf16.mxu0 0
  %607 = vmatpush1.bf16.msra.mxu0 0
  %608 = vmatprep.subr.bf16.mxu0 0
  %609 = vmatpush1.bf16.msra.mxu0 0
  %610 = vmatprep.subr.bf16.mxu0 0
  %611 = vmatpush1.bf16.msra.mxu0 0
  %612 = vmatprep.subr.bf16.mxu0 0
  %613 = vmatpush1.bf16.msra.mxu0 0
  %614 = vmatprep.subr.bf16.mxu0 0
  %615 = vmatpush1.bf16.msra.mxu0 0
  %616 = vmatprep.subr.bf16.mxu0 0
  %617 = vmatpush1.bf16.msra.mxu0 0
  %618 = vmatprep.subr.bf16.mxu0 0
  %619 = vmatpush1.bf16.msra.mxu0 0
  %620 = vmatprep.subr.bf16.mxu0 0
  %621 = vmatpush1.bf16.msra.mxu0 0
  %622 = vmatprep.subr.bf16.mxu0 0
  %623 = vmatpush1.bf16.msra.mxu0 0
  %624 = vmatprep.subr.bf16.mxu0 0
  %625 = vmatpush1.bf16.msra.mxu0 0
  %626 = vmatprep.subr.bf16.mxu0 0
  %627 = vmatpush1.bf16.msra.mxu0 0
  %628 = vmatprep.subr.bf16.mxu0 0
  %629 = vmatpush1.bf16.msra.mxu0 0
  %630 = vmatprep.subr.bf16.mxu0 0
  %631 = vmatpush1.bf16.msra.mxu0 0
  %632 = vmatprep.subr.bf16.mxu0 0
  %633 = vmatpush1.bf16.msra.mxu0 0
  %634 = vmatprep.mubr.bf16.mxu0 0
  %635 = vmatmul.mubr.bf16.gmra.mrb[0].mxu0 %v597
  %v636 = vpop.f32.mrb[0].mxu0
  %v637 = vadd.f32 %v37, %v636
  %v638 = vpop.f32.mrb[0].mxu0
  %v639 = vpop.f32.mrb[0].mxu0
  %v640 = vadd.f32 %v37, %v639
  %v641 = vpop.f32.mrb[0].mxu0
  %642 = vmatprep.mubr.bf16.mxu0 0
  %643 = vmatmul.mubr.bf16.gmra.mrb[0].mxu0 %v600
  %v644 = vpop.f32.mrb[0].mxu0
  %v645 = vadd.f32 %v37, %v644
  %v646 = vpop.f32.mrb[0].mxu0
  %v647 = vpop.f32.mrb[0].mxu0
  %v648 = vadd.f32 %v37, %v647
  %v649 = vpop.f32.mrb[0].mxu0
  %650 = vdwg.mxu0
  %v651 = vmax.f32 %v637, 0.0
  %v652 = vmax.f32 %v640, 0.0
  %v653 = vmax.f32 %v645, 0.0
  %v654 = vmax.f32 %v648, 0.0
  %v655 = vadd.f32 %v577, %v651
  %v656 = vadd.f32 %v578, %v652
  %v657 = vadd.f32 %v579, %v653
  %v658 = vadd.f32 %v580, %v654
  %s659 = scalar_lea.vmem %s0, 128
  %v660 = vld [vmem:[%s659] sm:$0xf]
  %v661 = vld [vmem:[%s659 + $0x4] sm:$0xf]
  %v662 = vld [vmem:[%s659 + $0x8] sm:$0xf]
  %v663 = vld [vmem:[%s659 + $0xc] sm:$0xf]
  %v668 = vunpack.c.l.b16 %v660
  %v669 = vunpack.c.l.b16 %v661
  %v670 = vunpack.c.l.b16 %v662
  %v671 = vunpack.c.l.b16 %v663
  %v672 = vpack.c.b16 %v669, %v668
  %v673 = vpack.c.b16 %v671, %v670
  %v675 = vsel %vm49, %v672, 0
  %v678 = vsel %vm49, %v673, 0
  %680 = vmatprep.subr.bf16.mxu0 0
  %681 = vmatpush1.bf16.msra.mxu0 %v58
  %682 = vmatprep.subr.bf16.mxu0 0
  %683 = vmatpush1.bf16.msra.mxu0 0
  %684 = vmatprep.subr.bf16.mxu0 0
  %685 = vmatpush1.bf16.msra.mxu0 0
  %686 = vmatprep.subr.bf16.mxu0 0
  %687 = vmatpush1.bf16.msra.mxu0 0
  %688 = vmatprep.subr.bf16.mxu0 0
  %689 = vmatpush1.bf16.msra.mxu0 0
  %690 = vmatprep.subr.bf16.mxu0 0
  %691 = vmatpush1.bf16.msra.mxu0 0
  %692 = vmatprep.subr.bf16.mxu0 0
  %693 = vmatpush1.bf16.msra.mxu0 0
  %694 = vmatprep.subr.bf16.mxu0 0
  %695 = vmatpush1.bf16.msra.mxu0 0
  %696 = vmatprep.subr.bf16.mxu0 0
  %697 = vmatpush1.bf16.msra.mxu0 0
  %698 = vmatprep.subr.bf16.mxu0 0
  %699 = vmatpush1.bf16.msra.mxu0 0
  %700 = vmatprep.subr.bf16.mxu0 0
  %701 = vmatpush1.bf16.msra.mxu0 0
  %702 = vmatprep.subr.bf16.mxu0 0
  %703 = vmatpush1.bf16.msra.mxu0 0
  %704 = vmatprep.subr.bf16.mxu0 0
  %705 = vmatpush1.bf16.msra.mxu0 0
  %706 = vmatprep.subr.bf16.mxu0 0
  %707 = vmatpush1.bf16.msra.mxu0 0
  %708 = vmatprep.subr.bf16.mxu0 0
  %709 = vmatpush1.bf16.msra.mxu0 0
  %710 = vmatprep.subr.bf16.mxu0 0
  %711 = vmatpush1.bf16.msra.mxu0 0
  %712 = vmatprep.mubr.bf16.mxu0 0
  %713 = vmatmul.mubr.bf16.gmra.mrb[0].mxu0 %v675
  %v714 = vpop.f32.mrb[0].mxu0
  %v715 = vadd.f32 %v37, %v714
  %v716 = vpop.f32.mrb[0].mxu0
  %v717 = vpop.f32.mrb[0].mxu0
  %v718 = vadd.f32 %v37, %v717
  %v719 = vpop.f32.mrb[0].mxu0
  %720 = vmatprep.mubr.bf16.mxu0 0
  %721 = vmatmul.mubr.bf16.gmra.mrb[0].mxu0 %v678
  %v722 = vpop.f32.mrb[0].mxu0
  %v723 = vadd.f32 %v37, %v722
  %v724 = vpop.f32.mrb[0].mxu0
  %v725 = vpop.f32.mrb[0].mxu0
  %v726 = vadd.f32 %v37, %v725
  %v727 = vpop.f32.mrb[0].mxu0
  %728 = vdwg.mxu0
  %v729 = vmax.f32 %v715, 0.0
  %v730 = vmax.f32 %v718, 0.0
  %v731 = vmax.f32 %v723, 0.0
  %v732 = vmax.f32 %v726, 0.0
  %v733 = vadd.f32 %v655, %v729
  %v734 = vadd.f32 %v656, %v730
  %v735 = vadd.f32 %v657, %v731
  %v736 = vadd.f32 %v658, %v732
  %s737 = scalar_lea.vmem %s0, 144
  %v738 = vld [vmem:[%s737] sm:$0xf]
  %v739 = vld [vmem:[%s737 + $0x4] sm:$0xf]
  %v740 = vld [vmem:[%s737 + $0x8] sm:$0xf]
  %v741 = vld [vmem:[%s737 + $0xc] sm:$0xf]
  %v746 = vunpack.c.l.b16 %v738
  %v747 = vunpack.c.l.b16 %v739
  %v748 = vunpack.c.l.b16 %v740
  %v749 = vunpack.c.l.b16 %v741
  %v750 = vpack.c.b16 %v747, %v746
  %v751 = vpack.c.b16 %v749, %v748
  %v753 = vsel %vm49, %v750, 0
  %v756 = vsel %vm49, %v751, 0
  %758 = vmatprep.subr.bf16.mxu0 0
  %759 = vmatpush1.bf16.msra.mxu0 %v58
  %760 = vmatprep.subr.bf16.mxu0 0
  %761 = vmatpush1.bf16.msra.mxu0 0
  %762 = vmatprep.subr.bf16.mxu0 0
  %763 = vmatpush1.bf16.msra.mxu0 0
  %764 = vmatprep.subr.bf16.mxu0 0
  %765 = vmatpush1.bf16.msra.mxu0 0
  %766 = vmatprep.subr.bf16.mxu0 0
  %767 = vmatpush1.bf16.msra.mxu0 0
  %768 = vmatprep.subr.bf16.mxu0 0
  %769 = vmatpush1.bf16.msra.mxu0 0
  %770 = vmatprep.subr.bf16.mxu0 0
  %771 = vmatpush1.bf16.msra.mxu0 0
  %772 = vmatprep.subr.bf16.mxu0 0
  %773 = vmatpush1.bf16.msra.mxu0 0
  %774 = vmatprep.subr.bf16.mxu0 0
  %775 = vmatpush1.bf16.msra.mxu0 0
  %776 = vmatprep.subr.bf16.mxu0 0
  %777 = vmatpush1.bf16.msra.mxu0 0
  %778 = vmatprep.subr.bf16.mxu0 0
  %779 = vmatpush1.bf16.msra.mxu0 0
  %780 = vmatprep.subr.bf16.mxu0 0
  %781 = vmatpush1.bf16.msra.mxu0 0
  %782 = vmatprep.subr.bf16.mxu0 0
  %783 = vmatpush1.bf16.msra.mxu0 0
  %784 = vmatprep.subr.bf16.mxu0 0
  %785 = vmatpush1.bf16.msra.mxu0 0
  %786 = vmatprep.subr.bf16.mxu0 0
  %787 = vmatpush1.bf16.msra.mxu0 0
  %788 = vmatprep.subr.bf16.mxu0 0
  %789 = vmatpush1.bf16.msra.mxu0 0
  %790 = vmatprep.mubr.bf16.mxu0 0
  %791 = vmatmul.mubr.bf16.gmra.mrb[0].mxu0 %v753
  %v792 = vpop.f32.mrb[0].mxu0
  %v793 = vadd.f32 %v37, %v792
  %v794 = vpop.f32.mrb[0].mxu0
  %v795 = vpop.f32.mrb[0].mxu0
  %v796 = vadd.f32 %v37, %v795
  %v797 = vpop.f32.mrb[0].mxu0
  %798 = vmatprep.mubr.bf16.mxu0 0
  %799 = vmatmul.mubr.bf16.gmra.mrb[0].mxu0 %v756
  %v800 = vpop.f32.mrb[0].mxu0
  %v801 = vadd.f32 %v37, %v800
  %v802 = vpop.f32.mrb[0].mxu0
  %v803 = vpop.f32.mrb[0].mxu0
  %v804 = vadd.f32 %v37, %v803
  %v805 = vpop.f32.mrb[0].mxu0
  %806 = vdwg.mxu0
  %v807 = vmax.f32 %v793, 0.0
  %v808 = vmax.f32 %v796, 0.0
  %v809 = vmax.f32 %v801, 0.0
  %v810 = vmax.f32 %v804, 0.0
  %v811 = vadd.f32 %v733, %v807
  %v812 = vadd.f32 %v734, %v808
  %v813 = vadd.f32 %v735, %v809
  %v814 = vadd.f32 %v736, %v810
  %s815 = scalar_lea.vmem %s0, 160
  %v816 = vld [vmem:[%s815] sm:$0xf]
  %v817 = vld [vmem:[%s815 + $0x4] sm:$0xf]
  %v818 = vld [vmem:[%s815 + $0x8] sm:$0xf]
  %v819 = vld [vmem:[%s815 + $0xc] sm:$0xf]
  %v824 = vunpack.c.l.b16 %v816
  %v825 = vunpack.c.l.b16 %v817
  %v826 = vunpack.c.l.b16 %v818
  %v827 = vunpack.c.l.b16 %v819
  %v828 = vpack.c.b16 %v825, %v824
  %v829 = vpack.c.b16 %v827, %v826
  %v831 = vsel %vm49, %v828, 0
  %v834 = vsel %vm49, %v829, 0
  %836 = vmatprep.subr.bf16.mxu0 0
  %837 = vmatpush1.bf16.msra.mxu0 %v58
  %838 = vmatprep.subr.bf16.mxu0 0
  %839 = vmatpush1.bf16.msra.mxu0 0
  %840 = vmatprep.subr.bf16.mxu0 0
  %841 = vmatpush1.bf16.msra.mxu0 0
  %842 = vmatprep.subr.bf16.mxu0 0
  %843 = vmatpush1.bf16.msra.mxu0 0
  %844 = vmatprep.subr.bf16.mxu0 0
  %845 = vmatpush1.bf16.msra.mxu0 0
  %846 = vmatprep.subr.bf16.mxu0 0
  %847 = vmatpush1.bf16.msra.mxu0 0
  %848 = vmatprep.subr.bf16.mxu0 0
  %849 = vmatpush1.bf16.msra.mxu0 0
  %850 = vmatprep.subr.bf16.mxu0 0
  %851 = vmatpush1.bf16.msra.mxu0 0
  %852 = vmatprep.subr.bf16.mxu0 0
  %853 = vmatpush1.bf16.msra.mxu0 0
  %854 = vmatprep.subr.bf16.mxu0 0
  %855 = vmatpush1.bf16.msra.mxu0 0
  %856 = vmatprep.subr.bf16.mxu0 0
  %857 = vmatpush1.bf16.msra.mxu0 0
  %858 = vmatprep.subr.bf16.mxu0 0
  %859 = vmatpush1.bf16.msra.mxu0 0
  %860 = vmatprep.subr.bf16.mxu0 0
  %861 = vmatpush1.bf16.msra.mxu0 0
  %862 = vmatprep.subr.bf16.mxu0 0
  %863 = vmatpush1.bf16.msra.mxu0 0
  %864 = vmatprep.subr.bf16.mxu0 0
  %865 = vmatpush1.bf16.msra.mxu0 0
  %866 = vmatprep.subr.bf16.mxu0 0
  %867 = vmatpush1.bf16.msra.mxu0 0
  %868 = vmatprep.mubr.bf16.mxu0 0
  %869 = vmatmul.mubr.bf16.gmra.mrb[0].mxu0 %v831
  %v870 = vpop.f32.mrb[0].mxu0
  %v871 = vadd.f32 %v37, %v870
  %v872 = vpop.f32.mrb[0].mxu0
  %v873 = vpop.f32.mrb[0].mxu0
  %v874 = vadd.f32 %v37, %v873
  %v875 = vpop.f32.mrb[0].mxu0
  %876 = vmatprep.mubr.bf16.mxu0 0
  %877 = vmatmul.mubr.bf16.gmra.mrb[0].mxu0 %v834
  %v878 = vpop.f32.mrb[0].mxu0
  %v879 = vadd.f32 %v37, %v878
  %v880 = vpop.f32.mrb[0].mxu0
  %v881 = vpop.f32.mrb[0].mxu0
  %v882 = vadd.f32 %v37, %v881
  %v883 = vpop.f32.mrb[0].mxu0
  %884 = vdwg.mxu0
  %v885 = vmax.f32 %v871, 0.0
  %v886 = vmax.f32 %v874, 0.0
  %v887 = vmax.f32 %v879, 0.0
  %v888 = vmax.f32 %v882, 0.0
  %v889 = vadd.f32 %v811, %v885
  %v890 = vadd.f32 %v812, %v886
  %v891 = vadd.f32 %v813, %v887
  %v892 = vadd.f32 %v814, %v888
  %s893 = scalar_lea.vmem %s0, 176
  %v894 = vld [vmem:[%s893] sm:$0xf]
  %v895 = vld [vmem:[%s893 + $0x4] sm:$0xf]
  %v896 = vld [vmem:[%s893 + $0x8] sm:$0xf]
  %v897 = vld [vmem:[%s893 + $0xc] sm:$0xf]
  %v902 = vunpack.c.l.b16 %v894
  %v903 = vunpack.c.l.b16 %v895
  %v904 = vunpack.c.l.b16 %v896
  %v905 = vunpack.c.l.b16 %v897
  %v906 = vpack.c.b16 %v903, %v902
  %v907 = vpack.c.b16 %v905, %v904
  %v909 = vsel %vm49, %v906, 0
  %v912 = vsel %vm49, %v907, 0
  %914 = vmatprep.subr.bf16.mxu0 0
  %915 = vmatpush1.bf16.msra.mxu0 %v58
  %916 = vmatprep.subr.bf16.mxu0 0
  %917 = vmatpush1.bf16.msra.mxu0 0
  %918 = vmatprep.subr.bf16.mxu0 0
  %919 = vmatpush1.bf16.msra.mxu0 0
  %920 = vmatprep.subr.bf16.mxu0 0
  %921 = vmatpush1.bf16.msra.mxu0 0
  %922 = vmatprep.subr.bf16.mxu0 0
  %923 = vmatpush1.bf16.msra.mxu0 0
  %924 = vmatprep.subr.bf16.mxu0 0
  %925 = vmatpush1.bf16.msra.mxu0 0
  %926 = vmatprep.subr.bf16.mxu0 0
  %927 = vmatpush1.bf16.msra.mxu0 0
  %928 = vmatprep.subr.bf16.mxu0 0
  %929 = vmatpush1.bf16.msra.mxu0 0
  %930 = vmatprep.subr.bf16.mxu0 0
  %931 = vmatpush1.bf16.msra.mxu0 0
  %932 = vmatprep.subr.bf16.mxu0 0
  %933 = vmatpush1.bf16.msra.mxu0 0
  %934 = vmatprep.subr.bf16.mxu0 0
  %935 = vmatpush1.bf16.msra.mxu0 0
  %936 = vmatprep.subr.bf16.mxu0 0
  %937 = vmatpush1.bf16.msra.mxu0 0
  %938 = vmatprep.subr.bf16.mxu0 0
  %939 = vmatpush1.bf16.msra.mxu0 0
  %940 = vmatprep.subr.bf16.mxu0 0
  %941 = vmatpush1.bf16.msra.mxu0 0
  %942 = vmatprep.subr.bf16.mxu0 0
  %943 = vmatpush1.bf16.msra.mxu0 0
  %944 = vmatprep.subr.bf16.mxu0 0
  %945 = vmatpush1.bf16.msra.mxu0 0
  %946 = vmatprep.mubr.bf16.mxu0 0
  %947 = vmatmul.mubr.bf16.gmra.mrb[0].mxu0 %v909
  %v948 = vpop.f32.mrb[0].mxu0
  %v949 = vadd.f32 %v37, %v948
  %v950 = vpop.f32.mrb[0].mxu0
  %v951 = vpop.f32.mrb[0].mxu0
  %v952 = vadd.f32 %v37, %v951
  %v953 = vpop.f32.mrb[0].mxu0
  %954 = vmatprep.mubr.bf16.mxu0 0
  %955 = vmatmul.mubr.bf16.gmra.mrb[0].mxu0 %v912
  %v956 = vpop.f32.mrb[0].mxu0
  %v957 = vadd.f32 %v37, %v956
  %v958 = vpop.f32.mrb[0].mxu0
  %v959 = vpop.f32.mrb[0].mxu0
  %v960 = vadd.f32 %v37, %v959
  %v961 = vpop.f32.mrb[0].mxu0
  %962 = vdwg.mxu0
  %v963 = vmax.f32 %v949, 0.0
  %v964 = vmax.f32 %v952, 0.0
  %v965 = vmax.f32 %v957, 0.0
  %v966 = vmax.f32 %v960, 0.0
  %v967 = vadd.f32 %v889, %v963
  %v968 = vadd.f32 %v890, %v964
  %v969 = vadd.f32 %v891, %v965
  %v970 = vadd.f32 %v892, %v966
  %s971 = scalar_lea.vmem %s0, 192
  %v972 = vld [vmem:[%s971] sm:$0xf]
  %v973 = vld [vmem:[%s971 + $0x4] sm:$0xf]
  %v974 = vld [vmem:[%s971 + $0x8] sm:$0xf]
  %v975 = vld [vmem:[%s971 + $0xc] sm:$0xf]
  %v980 = vunpack.c.l.b16 %v972
  %v981 = vunpack.c.l.b16 %v973
  %v982 = vunpack.c.l.b16 %v974
  %v983 = vunpack.c.l.b16 %v975
  %v984 = vpack.c.b16 %v981, %v980
  %v985 = vpack.c.b16 %v983, %v982
  %v987 = vsel %vm49, %v984, 0
  %v990 = vsel %vm49, %v985, 0
  %992 = vmatprep.subr.bf16.mxu0 0
  %993 = vmatpush1.bf16.msra.mxu0 %v58
  %994 = vmatprep.subr.bf16.mxu0 0
  %995 = vmatpush1.bf16.msra.mxu0 0
  %996 = vmatprep.subr.bf16.mxu0 0
  %997 = vmatpush1.bf16.msra.mxu0 0
  %998 = vmatprep.subr.bf16.mxu0 0
  %999 = vmatpush1.bf16.msra.mxu0 0
  %1000 = vmatprep.subr.bf16.mxu0 0
  %1001 = vmatpush1.bf16.msra.mxu0 0
  %1002 = vmatprep.subr.bf16.mxu0 0
  %1003 = vmatpush1.bf16.msra.mxu0 0
  %1004 = vmatprep.subr.bf16.mxu0 0
  %1005 = vmatpush1.bf16.msra.mxu0 0
  %1006 = vmatprep.subr.bf16.mxu0 0
  %1007 = vmatpush1.bf16.msra.mxu0 0
  %1008 = vmatprep.subr.bf16.mxu0 0
  %1009 = vmatpush1.bf16.msra.mxu0 0
  %1010 = vmatprep.subr.bf16.mxu0 0
  %1011 = vmatpush1.bf16.msra.mxu0 0
  %1012 = vmatprep.subr.bf16.mxu0 0
  %1013 = vmatpush1.bf16.msra.mxu0 0
  %1014 = vmatprep.subr.bf16.mxu0 0
  %1015 = vmatpush1.bf16.msra.mxu0 0
  %1016 = vmatprep.subr.bf16.mxu0 0
  %1017 = vmatpush1.bf16.msra.mxu0 0
  %1018 = vmatprep.subr.bf16.mxu0 0
  %1019 = vmatpush1.bf16.msra.mxu0 0
  %1020 = vmatprep.subr.bf16.mxu0 0
  %1021 = vmatpush1.bf16.msra.mxu0 0
  %1022 = vmatprep.subr.bf16.mxu0 0
  %1023 = vmatpush1.bf16.msra.mxu0 0
  %1024 = vmatprep.mubr.bf16.mxu0 0
  %1025 = vmatmul.mubr.bf16.gmra.mrb[0].mxu0 %v987
  %v1026 = vpop.f32.mrb[0].mxu0
  %v1027 = vadd.f32 %v37, %v1026
  %v1028 = vpop.f32.mrb[0].mxu0
  %v1029 = vpop.f32.mrb[0].mxu0
  %v1030 = vadd.f32 %v37, %v1029
  %v1031 = vpop.f32.mrb[0].mxu0
  %1032 = vmatprep.mubr.bf16.mxu0 0
  %1033 = vmatmul.mubr.bf16.gmra.mrb[0].mxu0 %v990
  %v1034 = vpop.f32.mrb[0].mxu0
  %v1035 = vadd.f32 %v37, %v1034
  %v1036 = vpop.f32.mrb[0].mxu0
  %v1037 = vpop.f32.mrb[0].mxu0
  %v1038 = vadd.f32 %v37, %v1037
  %v1039 = vpop.f32.mrb[0].mxu0
  %1040 = vdwg.mxu0
  %v1041 = vmax.f32 %v1027, 0.0
  %v1042 = vmax.f32 %v1030, 0.0
  %v1043 = vmax.f32 %v1035, 0.0
  %v1044 = vmax.f32 %v1038, 0.0
  %v1045 = vadd.f32 %v967, %v1041
  %v1046 = vadd.f32 %v968, %v1042
  %v1047 = vadd.f32 %v969, %v1043
  %v1048 = vadd.f32 %v970, %v1044
  %s1049 = scalar_lea.vmem %s0, 208
  %v1050 = vld [vmem:[%s1049] sm:$0xf]
  %v1051 = vld [vmem:[%s1049 + $0x4] sm:$0xf]
  %v1052 = vld [vmem:[%s1049 + $0x8] sm:$0xf]
  %v1053 = vld [vmem:[%s1049 + $0xc] sm:$0xf]
  %v1058 = vunpack.c.l.b16 %v1050
  %v1059 = vunpack.c.l.b16 %v1051
  %v1060 = vunpack.c.l.b16 %v1052
  %v1061 = vunpack.c.l.b16 %v1053
  %v1062 = vpack.c.b16 %v1059, %v1058
  %v1063 = vpack.c.b16 %v1061, %v1060
  %v1065 = vsel %vm49, %v1062, 0
  %v1068 = vsel %vm49, %v1063, 0
  %1070 = vmatprep.subr.bf16.mxu0 0
  %1071 = vmatpush1.bf16.msra.mxu0 %v58
  %1072 = vmatprep.subr.bf16.mxu0 0
  %1073 = vmatpush1.bf16.msra.mxu0 0
  %1074 = vmatprep.subr.bf16.mxu0 0
  %1075 = vmatpush1.bf16.msra.mxu0 0
  %1076 = vmatprep.subr.bf16.mxu0 0
  %1077 = vmatpush1.bf16.msra.mxu0 0
  %1078 = vmatprep.subr.bf16.mxu0 0
  %1079 = vmatpush1.bf16.msra.mxu0 0
  %1080 = vmatprep.subr.bf16.mxu0 0
  %1081 = vmatpush1.bf16.msra.mxu0 0
  %1082 = vmatprep.subr.bf16.mxu0 0
  %1083 = vmatpush1.bf16.msra.mxu0 0
  %1084 = vmatprep.subr.bf16.mxu0 0
  %1085 = vmatpush1.bf16.msra.mxu0 0
  %1086 = vmatprep.subr.bf16.mxu0 0
  %1087 = vmatpush1.bf16.msra.mxu0 0
  %1088 = vmatprep.subr.bf16.mxu0 0
  %1089 = vmatpush1.bf16.msra.mxu0 0
  %1090 = vmatprep.subr.bf16.mxu0 0
  %1091 = vmatpush1.bf16.msra.mxu0 0
  %1092 = vmatprep.subr.bf16.mxu0 0
  %1093 = vmatpush1.bf16.msra.mxu0 0
  %1094 = vmatprep.subr.bf16.mxu0 0
  %1095 = vmatpush1.bf16.msra.mxu0 0
  %1096 = vmatprep.subr.bf16.mxu0 0
  %1097 = vmatpush1.bf16.msra.mxu0 0
  %1098 = vmatprep.subr.bf16.mxu0 0
  %1099 = vmatpush1.bf16.msra.mxu0 0
  %1100 = vmatprep.subr.bf16.mxu0 0
  %1101 = vmatpush1.bf16.msra.mxu0 0
  %1102 = vmatprep.mubr.bf16.mxu0 0
  %1103 = vmatmul.mubr.bf16.gmra.mrb[0].mxu0 %v1065
  %v1104 = vpop.f32.mrb[0].mxu0
  %v1105 = vadd.f32 %v37, %v1104
  %v1106 = vpop.f32.mrb[0].mxu0
  %v1107 = vpop.f32.mrb[0].mxu0
  %v1108 = vadd.f32 %v37, %v1107
  %v1109 = vpop.f32.mrb[0].mxu0
  %1110 = vmatprep.mubr.bf16.mxu0 0
  %1111 = vmatmul.mubr.bf16.gmra.mrb[0].mxu0 %v1068
  %v1112 = vpop.f32.mrb[0].mxu0
  %v1113 = vadd.f32 %v37, %v1112
  %v1114 = vpop.f32.mrb[0].mxu0
  %v1115 = vpop.f32.mrb[0].mxu0
  %v1116 = vadd.f32 %v37, %v1115
  %v1117 = vpop.f32.mrb[0].mxu0
  %1118 = vdwg.mxu0
  %v1119 = vmax.f32 %v1105, 0.0
  %v1120 = vmax.f32 %v1108, 0.0
  %v1121 = vmax.f32 %v1113, 0.0
  %v1122 = vmax.f32 %v1116, 0.0
  %v1123 = vadd.f32 %v1045, %v1119
  %v1124 = vadd.f32 %v1046, %v1120
  %v1125 = vadd.f32 %v1047, %v1121
  %v1126 = vadd.f32 %v1048, %v1122
  %s1127 = scalar_lea.vmem %s0, 224
  %v1128 = vld [vmem:[%s1127] sm:$0xf]
  %v1129 = vld [vmem:[%s1127 + $0x4] sm:$0xf]
  %v1130 = vld [vmem:[%s1127 + $0x8] sm:$0xf]
  %v1131 = vld [vmem:[%s1127 + $0xc] sm:$0xf]
  %v1136 = vunpack.c.l.b16 %v1128
  %v1137 = vunpack.c.l.b16 %v1129
  %v1138 = vunpack.c.l.b16 %v1130
  %v1139 = vunpack.c.l.b16 %v1131
  %v1140 = vpack.c.b16 %v1137, %v1136
  %v1141 = vpack.c.b16 %v1139, %v1138
  %v1143 = vsel %vm49, %v1140, 0
  %v1146 = vsel %vm49, %v1141, 0
  %1148 = vmatprep.subr.bf16.mxu0 0
  %1149 = vmatpush1.bf16.msra.mxu0 %v58
  %1150 = vmatprep.subr.bf16.mxu0 0
  %1151 = vmatpush1.bf16.msra.mxu0 0
  %1152 = vmatprep.subr.bf16.mxu0 0
  %1153 = vmatpush1.bf16.msra.mxu0 0
  %1154 = vmatprep.subr.bf16.mxu0 0
  %1155 = vmatpush1.bf16.msra.mxu0 0
  %1156 = vmatprep.subr.bf16.mxu0 0
  %1157 = vmatpush1.bf16.msra.mxu0 0
  %1158 = vmatprep.subr.bf16.mxu0 0
  %1159 = vmatpush1.bf16.msra.mxu0 0
  %1160 = vmatprep.subr.bf16.mxu0 0
  %1161 = vmatpush1.bf16.msra.mxu0 0
  %1162 = vmatprep.subr.bf16.mxu0 0
  %1163 = vmatpush1.bf16.msra.mxu0 0
  %1164 = vmatprep.subr.bf16.mxu0 0
  %1165 = vmatpush1.bf16.msra.mxu0 0
  %1166 = vmatprep.subr.bf16.mxu0 0
  %1167 = vmatpush1.bf16.msra.mxu0 0
  %1168 = vmatprep.subr.bf16.mxu0 0
  %1169 = vmatpush1.bf16.msra.mxu0 0
  %1170 = vmatprep.subr.bf16.mxu0 0
  %1171 = vmatpush1.bf16.msra.mxu0 0
  %1172 = vmatprep.subr.bf16.mxu0 0
  %1173 = vmatpush1.bf16.msra.mxu0 0
  %1174 = vmatprep.subr.bf16.mxu0 0
  %1175 = vmatpush1.bf16.msra.mxu0 0
  %1176 = vmatprep.subr.bf16.mxu0 0
  %1177 = vmatpush1.bf16.msra.mxu0 0
  %1178 = vmatprep.subr.bf16.mxu0 0
  %1179 = vmatpush1.bf16.msra.mxu0 0
  %1180 = vmatprep.mubr.bf16.mxu0 0
  %1181 = vmatmul.mubr.bf16.gmra.mrb[0].mxu0 %v1143
  %v1182 = vpop.f32.mrb[0].mxu0
  %v1183 = vadd.f32 %v37, %v1182
  %v1184 = vpop.f32.mrb[0].mxu0
  %v1185 = vpop.f32.mrb[0].mxu0
  %v1186 = vadd.f32 %v37, %v1185
  %v1187 = vpop.f32.mrb[0].mxu0
  %1188 = vmatprep.mubr.bf16.mxu0 0
  %1189 = vmatmul.mubr.bf16.gmra.mrb[0].mxu0 %v1146
  %v1190 = vpop.f32.mrb[0].mxu0
  %v1191 = vadd.f32 %v37, %v1190
  %v1192 = vpop.f32.mrb[0].mxu0
  %v1193 = vpop.f32.mrb[0].mxu0
  %v1194 = vadd.f32 %v37, %v1193
  %v1195 = vpop.f32.mrb[0].mxu0
  %1196 = vdwg.mxu0
  %v1197 = vmax.f32 %v1183, 0.0
  %v1198 = vmax.f32 %v1186, 0.0
  %v1199 = vmax.f32 %v1191, 0.0
  %v1200 = vmax.f32 %v1194, 0.0
  %v1201 = vadd.f32 %v1123, %v1197
  %v1202 = vadd.f32 %v1124, %v1198
  %v1203 = vadd.f32 %v1125, %v1199
  %v1204 = vadd.f32 %v1126, %v1200
  %s1205 = scalar_lea.vmem %s0, 240
  %v1206 = vld [vmem:[%s1205] sm:$0xf]
  %v1207 = vld [vmem:[%s1205 + $0x4] sm:$0xf]
  %v1208 = vld [vmem:[%s1205 + $0x8] sm:$0xf]
  %v1209 = vld [vmem:[%s1205 + $0xc] sm:$0xf]
  %v1214 = vunpack.c.l.b16 %v1206
  %v1215 = vunpack.c.l.b16 %v1207
  %v1216 = vunpack.c.l.b16 %v1208
  %v1217 = vunpack.c.l.b16 %v1209
  %v1218 = vpack.c.b16 %v1215, %v1214
  %v1219 = vpack.c.b16 %v1217, %v1216
  %v1221 = vsel %vm49, %v1218, 0
  %v1224 = vsel %vm49, %v1219, 0
  %1226 = vmatprep.subr.bf16.mxu0 0
  %1227 = vmatpush1.bf16.msra.mxu0 %v58
  %1228 = vmatprep.subr.bf16.mxu0 0
  %1229 = vmatpush1.bf16.msra.mxu0 0
  %1230 = vmatprep.subr.bf16.mxu0 0
  %1231 = vmatpush1.bf16.msra.mxu0 0
  %1232 = vmatprep.subr.bf16.mxu0 0
  %1233 = vmatpush1.bf16.msra.mxu0 0
  %1234 = vmatprep.subr.bf16.mxu0 0
  %1235 = vmatpush1.bf16.msra.mxu0 0
  %1236 = vmatprep.subr.bf16.mxu0 0
  %1237 = vmatpush1.bf16.msra.mxu0 0
  %1238 = vmatprep.subr.bf16.mxu0 0
  %1239 = vmatpush1.bf16.msra.mxu0 0
  %1240 = vmatprep.subr.bf16.mxu0 0
  %1241 = vmatpush1.bf16.msra.mxu0 0
  %1242 = vmatprep.subr.bf16.mxu0 0
  %1243 = vmatpush1.bf16.msra.mxu0 0
  %1244 = vmatprep.subr.bf16.mxu0 0
  %1245 = vmatpush1.bf16.msra.mxu0 0
  %1246 = vmatprep.subr.bf16.mxu0 0
  %1247 = vmatpush1.bf16.msra.mxu0 0
  %1248 = vmatprep.subr.bf16.mxu0 0
  %1249 = vmatpush1.bf16.msra.mxu0 0
  %1250 = vmatprep.subr.bf16.mxu0 0
  %1251 = vmatpush1.bf16.msra.mxu0 0
  %1252 = vmatprep.subr.bf16.mxu0 0
  %1253 = vmatpush1.bf16.msra.mxu0 0
  %1254 = vmatprep.subr.bf16.mxu0 0
  %1255 = vmatpush1.bf16.msra.mxu0 0
  %1256 = vmatprep.subr.bf16.mxu0 0
  %1257 = vmatpush1.bf16.msra.mxu0 0
  %1258 = vmatprep.mubr.bf16.mxu0 0
  %1259 = vmatmul.mubr.bf16.gmra.mrb[0].mxu0 %v1221
  %v1260 = vpop.f32.mrb[0].mxu0
  %v1261 = vadd.f32 %v37, %v1260
  %v1262 = vpop.f32.mrb[0].mxu0
  %v1263 = vpop.f32.mrb[0].mxu0
  %v1264 = vadd.f32 %v37, %v1263
  %v1265 = vpop.f32.mrb[0].mxu0
  %1266 = vmatprep.mubr.bf16.mxu0 0
  %1267 = vmatmul.mubr.bf16.gmra.mrb[0].mxu0 %v1224
  %v1268 = vpop.f32.mrb[0].mxu0
  %v1269 = vadd.f32 %v37, %v1268
  %v1270 = vpop.f32.mrb[0].mxu0
  %v1271 = vpop.f32.mrb[0].mxu0
  %v1272 = vadd.f32 %v37, %v1271
  %v1273 = vpop.f32.mrb[0].mxu0
  %1274 = vdwg.mxu0
  %v1275 = vmax.f32 %v1261, 0.0
  %v1276 = vmax.f32 %v1264, 0.0
  %v1277 = vmax.f32 %v1269, 0.0
  %v1278 = vmax.f32 %v1272, 0.0
  %v1279 = vadd.f32 %v1201, %v1275
  %v1280 = vadd.f32 %v1202, %v1276
  %v1281 = vadd.f32 %v1203, %v1277
  %v1282 = vadd.f32 %v1204, %v1278
  %v1283 = vmul.f32 %v1279, 0.0625
  %v1284 = vmul.f32 %v1280, 0.0625
  %v1285 = vmul.f32 %v1281, 0.0625
  %v1286 = vmul.f32 %v1282, 0.0625
  %v1287 = vpack.c.bf16 %v1284, %v1283
  %v1288 = vpack.c.bf16 %v1286, %v1285
  %v1289 = vld [vmem:[%s3] sm:$0xf]
  %v1290 = vld [vmem:[%s3 + $0x4] sm:$0xf]
  %v1291 = vld [vmem:[%s3 + $0x8] sm:$0xf]
  %v1292 = vld [vmem:[%s3 + $0xc] sm:$0xf]
  %v1293 = vld [vmem:[%s4] sm:$0x1]
  %v1295 = vlaneseq
  %v1296 = vshrl.u32 %v1295, 7
  %v1297 = vsub.s32 0, %v1296
  %v1298 = vrot.slane %v1293, %v1297
  %v1304 = vunpack.c.l.b16 %v1289
  %v1305 = vunpack.c.l.b16 %v1290
  %v1306 = vunpack.c.l.b16 %v1291
  %v1307 = vunpack.c.l.b16 %v1292
  %v1308 = vpack.c.b16 %v1305, %v1304
  %v1309 = vpack.c.b16 %v1307, %v1306
  %vm1312 = vcmask 261120
  %v1314 = vsel %vm1312, %v1287, 0
  %v1317 = vsel %vm1312, %v1288, 0
  %1319 = vmatprep.subr.bf16.mxu0 0
  %1320 = vmatpush1.bf16.msra.mxu0 %v1308
  %1321 = vmatprep.subr.bf16.mxu0 0
  %1322 = vmatpush1.bf16.msra.mxu0 %v1309
  %1323 = vmatprep.subr.bf16.mxu0 0
  %1324 = vmatpush1.bf16.msra.mxu0 0
  %1325 = vmatprep.subr.bf16.mxu0 0
  %1326 = vmatpush1.bf16.msra.mxu0 0
  %1327 = vmatprep.subr.bf16.mxu0 0
  %1328 = vmatpush1.bf16.msra.mxu0 0
  %1329 = vmatprep.subr.bf16.mxu0 0
  %1330 = vmatpush1.bf16.msra.mxu0 0
  %1331 = vmatprep.subr.bf16.mxu0 0
  %1332 = vmatpush1.bf16.msra.mxu0 0
  %1333 = vmatprep.subr.bf16.mxu0 0
  %1334 = vmatpush1.bf16.msra.mxu0 0
  %1335 = vmatprep.subr.bf16.mxu0 0
  %1336 = vmatpush1.bf16.msra.mxu0 0
  %1337 = vmatprep.subr.bf16.mxu0 0
  %1338 = vmatpush1.bf16.msra.mxu0 0
  %1339 = vmatprep.subr.bf16.mxu0 0
  %1340 = vmatpush1.bf16.msra.mxu0 0
  %1341 = vmatprep.subr.bf16.mxu0 0
  %1342 = vmatpush1.bf16.msra.mxu0 0
  %1343 = vmatprep.subr.bf16.mxu0 0
  %1344 = vmatpush1.bf16.msra.mxu0 0
  %1345 = vmatprep.subr.bf16.mxu0 0
  %1346 = vmatpush1.bf16.msra.mxu0 0
  %1347 = vmatprep.subr.bf16.mxu0 0
  %1348 = vmatpush1.bf16.msra.mxu0 0
  %1349 = vmatprep.subr.bf16.mxu0 0
  %1350 = vmatpush1.bf16.msra.mxu0 0
  %1351 = vmatprep.mubr.bf16.mxu0 0
  %1352 = vmatmul.mubr.bf16.gmra.mrb[0].mxu0 %v1314
  %v1353 = vpop.f32.mrb[0].mxu0
  %v1354 = vadd.f32 %v1298, %v1353
  %v1355 = vpop.f32.mrb[0].mxu0
  %v1356 = vpop.f32.mrb[0].mxu0
  %v1357 = vadd.f32 %v1298, %v1356
  %v1358 = vpop.f32.mrb[0].mxu0
  %1359 = vmatprep.mubr.bf16.mxu0 0
  %1360 = vmatmul.mubr.bf16.gmra.mrb[0].mxu0 %v1317
  %v1361 = vpop.f32.mrb[0].mxu0
  %v1362 = vadd.f32 %v1298, %v1361
  %v1363 = vpop.f32.mrb[0].mxu0
  %v1364 = vpop.f32.mrb[0].mxu0
  %v1365 = vadd.f32 %v1298, %v1364
  %v1366 = vpop.f32.mrb[0].mxu0
  %1367 = vdwg.mxu0
  %v1368 = vmax.f32 %v1354, 0.0
  %v1369 = vmax.f32 %v1357, 0.0
  %v1370 = vmax.f32 %v1362, 0.0
  %v1371 = vmax.f32 %v1365, 0.0
  %v1372 = vpack.c.bf16 %v1369, %v1368
  %v1373 = vpack.c.bf16 %v1371, %v1370
  %v1374 = vld [vmem:[%s5] sm:$0x7]
  %v1375 = vld [vmem:[%s6] sm:$0x3f]
  %1377 = vset.pattern.permute.xlu0 0
  %1378 = vperm.xlu0 %1377, %v1375
  %v1379 = vpop.permute.xlu0 %1378
  %v1382 = vsel %vm1312, %v1374, 0
  %v1385 = vsel %vm1312, %v1372, 0
  %v1388 = vsel %vm1312, %v1373, 0
  %1390 = vmatprep.subr.bf16.mxu0 0
  %1391 = vmatpush1.bf16.xpose.msra.mxu0 %v1385
  %1392 = vmatprep.subr.bf16.mxu0 0
  %1393 = vmatpush1.bf16.xpose.msra.mxu0 %v1388
  %1394 = vmatprep.subr.bf16.mxu0 0
  %1395 = vmatpush1.bf16.xpose.msra.mxu0 0
  %1396 = vmatprep.subr.bf16.mxu0 0
  %1397 = vmatpush1.bf16.xpose.msra.mxu0 0
  %1398 = vmatprep.subr.bf16.mxu0 0
  %1399 = vmatpush1.bf16.xpose.msra.mxu0 0
  %1400 = vmatprep.subr.bf16.mxu0 0
  %1401 = vmatpush1.bf16.xpose.msra.mxu0 0
  %1402 = vmatprep.subr.bf16.mxu0 0
  %1403 = vmatpush1.bf16.xpose.msra.mxu0 0
  %1404 = vmatprep.subr.bf16.mxu0 0
  %1405 = vmatpush1.bf16.xpose.msra.mxu0 0
  %1406 = vmatprep.subr.bf16.mxu0 0
  %1407 = vmatpush1.bf16.xpose.msra.mxu0 0
  %1408 = vmatprep.subr.bf16.mxu0 0
  %1409 = vmatpush1.bf16.xpose.msra.mxu0 0
  %1410 = vmatprep.subr.bf16.mxu0 0
  %1411 = vmatpush1.bf16.xpose.msra.mxu0 0
  %1412 = vmatprep.subr.bf16.mxu0 0
  %1413 = vmatpush1.bf16.xpose.msra.mxu0 0
  %1414 = vmatprep.subr.bf16.mxu0 0
  %1415 = vmatpush1.bf16.xpose.msra.mxu0 0
  %1416 = vmatprep.subr.bf16.mxu0 0
  %1417 = vmatpush1.bf16.xpose.msra.mxu0 0
  %1418 = vmatprep.subr.bf16.mxu0 0
  %1419 = vmatpush1.bf16.xpose.msra.mxu0 0
  %1420 = vmatprep.subr.bf16.mxu0 0
  %1421 = vmatpush1.bf16.xpose.msra.mxu0 0
  %1422 = vmatprep.mubr.bf16.mxu0 0
  %1423 = vmatmul.mubr.bf16.gmra.mrb[0].mxu0 %v1382
  %v1424 = vpop.f32.mrb[0].mxu0
  %v1425 = vadd.f32 %v1379, %v1424
  %v1426 = vpop.f32.mrb[0].mxu0
  %v1427 = vpop.f32.mrb[0].mxu0
  %v1428 = vpop.f32.mrb[0].mxu0
  %1429 = vdwg.mxu0
  %v1430 = vpack.c.bf16 %v1425, %v1425
  %vm1431 = vcmask 256000
  %1432 = vst.msk [vmem:[%s7] sm:$0x7] %vm1431, %v1430
  // Predicated region
  $region30: #{incremental_segmentation_forward.2} parent=0 // pred_check
    _
  $region31: #{incremental_segmentation_forward.2} parent=0 // pred_check_branch
    %1434 = sbr.rel (0) target = $region33
  $region32: #{incremental_segmentation_forward.2} parent=0 // pred_region
    _
  $region33: #{incremental_segmentation_forward.2} parent=0 // pred_fallthru
    _
  // Predicated region
  $region34: #{incremental_segmentation_forward.2} parent=0 // pred_check
    _
  $region35: #{incremental_segmentation_forward.2} parent=0 // pred_check_branch
    %1436 = sbr.rel (0) target = $region37
  $region36: #{incremental_segmentation_forward.2} parent=0 // pred_region
    _
  $region37: #{incremental_segmentation_forward.2} parent=0 // pred_fallthru
    _

</llo_original>
